<compile_context>
chip_gen: v5e
topology: v5e:2x2
jax: 0.10.0
libtpu: 0.0.40
codegen_flags: <defaults>
</compile_context>

<pallas_src>
import functools

import jax
import jax.numpy as jnp
import numpy as np
from jax.experimental import pallas as pl
from jax.experimental.pallas import tpu as pltpu


# ---------------------------------------------------------------------------
# Kernels
# ---------------------------------------------------------------------------
def vae_fused_kernel(
    x_ref, eps_ref,
    w1_ref, b1_ref,          # encoder Linear(D, H1)
    w2_ref, b2_ref,          # encoder Linear(H1, H2p)   (H2 zero-padded to 128s)
    w3_ref, b3_ref,          # encoder Linear(H2p, H3)
    wmv_ref, bmv_ref,        # fused [fc_mu | fc_var] Linear(H3, 2*Lp)
    wd1_ref, bd1_ref,        # decoder Linear(Lp, H1)
    wd2_ref, bd2_ref,        # decoder Linear(H1, D)
    recon_ref, mulv_ref,
    *, latent_pad,
):
    """Whole forward for one batch tile; all weights VMEM-resident."""
    Lp = latent_pad
    cdt = w1_ref.dtype                      # bf16 MXU inputs, f32 accumulation

    # ---- encoder (Dropout in eval mode == identity) ----
    h = jnp.dot(x_ref[...], w1_ref[...],
                preferred_element_type=jnp.float32) + b1_ref[...]
    h = jnp.maximum(h, 0.0)
    h = jnp.dot(h.astype(cdt), w2_ref[...],
                preferred_element_type=jnp.float32) + b2_ref[...]
    h = jnp.maximum(h, 0.0)
    h = jnp.dot(h.astype(cdt), w3_ref[...],
                preferred_element_type=jnp.float32) + b3_ref[...]
    h = jnp.maximum(h, 0.0)

    # ---- fused latent heads; slices are 128-lane aligned ----
    mulv = jnp.dot(h.astype(cdt), wmv_ref[...],
                   preferred_element_type=jnp.float32) + bmv_ref[...]
    mu = mulv[:, :Lp]
    logvar = mulv[:, Lp:]

    # ---- reparameterize ----
    z = mu + eps_ref[...] * jnp.exp(0.5 * logvar)

    # ---- decoder ----
    d = jnp.dot(z.astype(cdt), wd1_ref[...],
                preferred_element_type=jnp.float32) + bd1_ref[...]
    d = jnp.maximum(d, 0.0)
    logits = jnp.dot(d.astype(cdt), wd2_ref[...],
                     preferred_element_type=jnp.float32) + bd2_ref[...]
    # sigmoid = 1 / (1 + exp(-x)); reciprocal kept on the EUP slot (approx=True)
    recon = pl.reciprocal(1.0 + jnp.exp(-logits), approx=True)
    recon_ref[...] = recon.astype(recon_ref.dtype)
    mulv_ref[...] = mulv


def vae_encoder_kernel(
    x_ref, eps_ref,
    w1_ref, b1_ref, w2_ref, b2_ref, w3_ref, b3_ref,
    wmv_ref, bmv_ref, wd1_ref, bd1_ref,
    dech_ref, mulv_ref,
    acc_ref,
    *, latent_pad,
):
    """D-tiled path, call 1: contraction over D tiles for x @ w1 (f32 accumulator),
    then the rest of the encoder + heads + reparam + decoder fc1 at the last D tile."""
    j = pl.program_id(1)

    @pl.when(j == 0)
    def _():
        acc_ref[...] = jnp.zeros_like(acc_ref)

    acc_ref[...] += jnp.dot(x_ref[...], w1_ref[...],
                            preferred_element_type=jnp.float32)

    @pl.when(j == pl.num_programs(1) - 1)
    def _():
        Lp = latent_pad
        cdt = w1_ref.dtype
        h = jnp.maximum(acc_ref[...] + b1_ref[...], 0.0)
        h = jnp.maximum(jnp.dot(h.astype(cdt), w2_ref[...],
                                preferred_element_type=jnp.float32) + b2_ref[...], 0.0)
        h = jnp.maximum(jnp.dot(h.astype(cdt), w3_ref[...],
                                preferred_element_type=jnp.float32) + b3_ref[...], 0.0)
        mulv = jnp.dot(h.astype(cdt), wmv_ref[...],
                       preferred_element_type=jnp.float32) + bmv_ref[...]
        mu = mulv[:, :Lp]
        logvar = mulv[:, Lp:]
        z = mu + eps_ref[...] * jnp.exp(0.5 * logvar)
        d = jnp.maximum(jnp.dot(z.astype(cdt), wd1_ref[...],
                                preferred_element_type=jnp.float32) + bd1_ref[...], 0.0)
        dech_ref[...] = d.astype(dech_ref.dtype)
        mulv_ref[...] = mulv


def vae_decoder_out_kernel(dech_ref, wd2_ref, bd2_ref, recon_ref):
    """D-tiled path, call 2: one output D tile of the last matmul + sigmoid."""
    logits = jnp.dot(dech_ref[...], wd2_ref[...],
                     preferred_element_type=jnp.float32) + bd2_ref[...]
    recon = pl.reciprocal(1.0 + jnp.exp(-logits), approx=True)
    recon_ref[...] = recon.astype(recon_ref.dtype)


# ---------------------------------------------------------------------------
# Helpers
# ---------------------------------------------------------------------------
def _round_up(n, m):
    return ((n + m - 1) // m) * m


def _tpu_caps():
    """Best-effort hardware query: MXU M width (128 v5e / 256 v6e,v7x) and VMEM bytes."""
    mxu_m = 128
    vmem_cap = 64 * 2 ** 20          # conservative default (v7x per-TC VMEM)
    try:
        kind = jax.devices()[0].device_kind.lower()
        if ("v6" in kind) or ("v7" in kind):
            mxu_m = 256
    except Exception:
        pass
    try:
        vmem_cap = int(pltpu.get_tpu_info().vmem_capacity_bytes)
    except Exception:
        pass
    return mxu_m, vmem_cap


def _pick_batch_tile(B, mxu_m):
    """Fill the MXU M dimension when B allows; floor of 8 only for tiny B.
    The B >= 512 gate for TB=256 keeps >=2 batch tiles so v7x's second TC has work."""
    if B <= 8:
        return 8
    cap = 256 if (mxu_m >= 256 and B >= 512) else 128
    return min(_round_up(B, 8), cap)


def _resident_spec(shape, grid_rank, single_buf):
    """Full-extent block, constant index_map -> VMEM-resident across grid steps.
    Optionally single-buffered (a second buffer for a never-changing block is waste)."""
    zeros = (0,) * len(shape)
    imap = (lambda i: zeros) if grid_rank == 1 else (lambda i, j: zeros)
    if single_buf:
        try:
            return pl.BlockSpec(shape, imap, pipeline_mode=pl.Buffered(1))
        except Exception:
            pass
    return pl.BlockSpec(shape, imap)


def prepare_params(params, compute_dtype=jnp.bfloat16):
    """Fuse mu/var heads, pad ragged dims to 128 lanes, cast weights to compute dtype.

    All padding is a mathematical identity: padded hidden units are ReLU(0)=0 and hit
    zero weight rows; padded latent columns have mu=0, logvar=0, eps=0 and hit zero
    rows of the decoder fc1.  Biases stay f32.
    """
    w1, b1 = params["w1"], params["b1"]
    w2, b2 = params["w2"], params["b2"]
    w3, b3 = params["w3"], params["b3"]

    h2 = w2.shape[1]
    h2p = _round_up(h2, 128)
    if h2p != h2:
        pad = h2p - h2
        w2 = jnp.pad(w2, ((0, 0), (0, pad)))
        b2 = jnp.pad(b2, ((0, 0), (0, pad)))
        w3 = jnp.pad(w3, ((0, pad), (0, 0)))

    L = params["wmu"].shape[1]
    Lp = _round_up(L, 128)
    pad_l = Lp - L
    wmu = jnp.pad(params["wmu"], ((0, 0), (0, pad_l)))
    wlv = jnp.pad(params["wlv"], ((0, 0), (0, pad_l)))
    bmu = jnp.pad(params["bmu"], ((0, 0), (0, pad_l)))
    blv = jnp.pad(params["blv"], ((0, 0), (0, pad_l)))
    wmv = jnp.concatenate([wmu, wlv], axis=1)          # (H3, 2*Lp), 128-aligned halves
    bmv = jnp.concatenate([bmu, blv], axis=1)          # (1, 2*Lp)
    wd1 = jnp.pad(params["wd1"], ((0, pad_l), (0, 0)))  # (Lp, H1)

    cw = lambda w: w.astype(compute_dtype)
    cb = lambda b: b.astype(jnp.float32)
    return dict(
        w1=cw(w1), b1=cb(b1),
        w2=cw(w2), b2=cb(b2),
        w3=cw(w3), b3=cb(b3),
        wmv=cw(wmv), bmv=cb(bmv),
        wd1=cw(wd1), bd1=cb(params["bd1"]),
        wd2=cw(params["wd2"]), bd2=cb(params["bd2"]),
    ), Lp


# ---------------------------------------------------------------------------
# Wrapper
# ---------------------------------------------------------------------------
def vae_forward(x_nchw, eps, params, *, compute_dtype=jnp.bfloat16,
                batch_tile=None, d_tile=None, force_tiled=False):
    """x_nchw: (B, C, H, W) f32 ; eps: (B, L) f32 ; params: raw f32 weight dict.

    Returns (recon (B,C,H,W) f32, mu (B,L) f32, logvar (B,L) f32).
    """
    B, C, H, W = x_nchw.shape
    D = C * H * W
    L = eps.shape[1]

    mxu_m, vmem_cap = _tpu_caps()
    vmem_limit = int(0.85 * vmem_cap)          # explicit scoped-VMEM limit with headroom

    p, Lp = prepare_params(params, compute_dtype)
    H1 = p["w1"].shape[1]
    H2p = p["w2"].shape[1]
    H3 = p["w3"].shape[1]

    TB = batch_tile if batch_tile is not None else _pick_batch_tile(B, mxu_m)
    Bp = pl.cdiv(B, TB) * TB

    bpe = jnp.dtype(compute_dtype).itemsize
    # Streamed activations in bf16 (halves HBM bytes + double-buffered VMEM).
    x_flat = x_nchw.reshape(B, D).astype(compute_dtype)
    eps_p = jnp.pad(eps, ((0, 0), (0, Lp - L))) if Lp != L else eps
    if Bp != B:
        x_flat = jnp.pad(x_flat, ((0, Bp - B), (0, 0)))
        eps_p = jnp.pad(eps_p, ((0, Bp - B), (0, 0)))

    # Worst-case VMEM footprint of the fully-resident fused kernel (weights assumed
    # double-buffered for safety, streamed tiles double-buffered, f32 intermediates).
    weight_bytes = sum(int(np.prod(v.shape)) * (bpe if k.startswith("w") else 4)
                       for k, v in p.items())
    fused_est = (2 * weight_bytes
                 + 2 * 2 * TB * D * bpe                       # x + recon tiles, 2 bufs
                 + TB * (D + H1 + H2p + H3 + 4 * Lp) * 4      # f32 intermediates
                 + 2 * TB * (3 * Lp) * 4)                     # eps + mulv buffers
    use_tiled = force_tiled or fused_est > int(0.8 * vmem_limit)

    if not use_tiled:
        # ---------------- fused single-kernel path (everything fits in VMEM) --------
        grid = (Bp // TB,)
        weight_inputs = (p["w1"], p["b1"], p["w2"], p["b2"], p["w3"], p["b3"],
                         p["wmv"], p["bmv"], p["wd1"], p["bd1"], p["wd2"], p["bd2"])
        cost = pl.CostEstimate(
            flops=int(2 * Bp * (D * H1 + H1 * H2p + H2p * H3 + H3 * 2 * Lp
                                + Lp * H1 + H1 * D)),
            transcendentals=int(Bp * (2 * D + 2 * Lp)),
            bytes_accessed=int(weight_bytes + 2 * Bp * D * bpe + Bp * 3 * Lp * 4),
        )

        def run(single_buf):
            in_specs = [
                pl.BlockSpec((TB, D), lambda i: (i, 0)),        # x tile streams
                pl.BlockSpec((TB, Lp), lambda i: (i, 0)),       # eps tile streams
            ] + [_resident_spec(w.shape, 1, single_buf) for w in weight_inputs]
            out_specs = [
                pl.BlockSpec((TB, D), lambda i: (i, 0)),        # recon (bf16, lane-dense)
                pl.BlockSpec((TB, 2 * Lp), lambda i: (i, 0)),   # [mu | logvar] slab
            ]
            out_shape = (
                jax.ShapeDtypeStruct((Bp, D), compute_dtype),
                jax.ShapeDtypeStruct((Bp, 2 * Lp), jnp.float32),
            )
            f = pl.pallas_call(
                functools.partial(vae_fused_kernel, latent_pad=Lp),
                grid=grid, in_specs=in_specs, out_specs=out_specs, out_shape=out_shape,
                compiler_params=pltpu.CompilerParams(
                    dimension_semantics=("parallel",),
                    vmem_limit_bytes=vmem_limit),
                cost_estimate=cost,
            )
            return jax.block_until_ready(f(x_flat, eps_p, *weight_inputs))

        try:
            recon_flat, mulv = run(True)       # resident weights single-buffered
        except Exception:
            recon_flat, mulv = run(False)      # fallback: default double-buffering

    else:
        # ---------------- D-tiled two-kernel path (large D / v7x 64 MiB VMEM) -------
        TD = d_tile if d_tile is not None else 8192
        TD = _round_up(min(TD, _round_up(D, 128)), 128)
        Dp = _round_up(D, TD)
        pad_d = Dp - D
        w1 = jnp.pad(p["w1"], ((0, pad_d), (0, 0))) if pad_d else p["w1"]
        wd2 = jnp.pad(p["wd2"], ((0, 0), (0, pad_d))) if pad_d else p["wd2"]
        bd2 = jnp.pad(p["bd2"], ((0, 0), (0, pad_d))) if pad_d else p["bd2"]
        x_p = jnp.pad(x_flat, ((0, 0), (0, pad_d))) if pad_d else x_flat
        nb, nd = Bp // TB, Dp // TD

        enc_inputs = (x_p, eps_p, w1, p["b1"], p["w2"], p["b2"], p["w3"], p["b3"],
                      p["wmv"], p["bmv"], p["wd1"], p["bd1"])
        enc_cost = pl.CostEstimate(
            flops=int(2 * Bp * (Dp * H1 + H1 * H2p + H2p * H3 + H3 * 2 * Lp + Lp * H1)),
            transcendentals=int(Bp * 2 * Lp),
            bytes_accessed=int(Bp * Dp * bpe + Dp * H1 * bpe + Bp * (H1 + 3 * Lp) * 4),
        )
        dec_cost = pl.CostEstimate(
            flops=int(2 * Bp * H1 * Dp),
            transcendentals=int(2 * Bp * Dp),
            bytes_accessed=int(Bp * H1 * bpe + H1 * Dp * bpe + Bp * Dp * bpe),
        )

        def run(single_buf):
            enc_in_specs = [
                pl.BlockSpec((TB, TD), lambda i, j: (i, j)),    # x tile streams over D
                pl.BlockSpec((TB, Lp), lambda i, j: (i, 0)),    # eps, per batch tile
                pl.BlockSpec((TD, H1), lambda i, j: (j, 0)),    # w1 tile streams over D
            ] + [_resident_spec(a.shape, 2, single_buf) for a in enc_inputs[3:]]
            dech, mulv = pl.pallas_call(
                functools.partial(vae_encoder_kernel, latent_pad=Lp),
                grid=(nb, nd),
                in_specs=enc_in_specs,
                out_specs=[pl.BlockSpec((TB, H1), lambda i, j: (i, 0)),
                           pl.BlockSpec((TB, 2 * Lp), lambda i, j: (i, 0))],
                out_shape=(jax.ShapeDtypeStruct((Bp, H1), compute_dtype),
                           jax.ShapeDtypeStruct((Bp, 2 * Lp), jnp.float32)),
                scratch_shapes=[pltpu.VMEM((TB, H1), jnp.float32)],
                compiler_params=pltpu.CompilerParams(
                    dimension_semantics=("parallel", "arbitrary"),
                    vmem_limit_bytes=vmem_limit),
                cost_estimate=enc_cost,
            )(*enc_inputs)

            recon_flat = pl.pallas_call(
                vae_decoder_out_kernel,
                grid=(nb, nd),
                in_specs=[pl.BlockSpec((TB, H1), lambda i, j: (i, 0)),
                          pl.BlockSpec((H1, TD), lambda i, j: (0, j)),
                          pl.BlockSpec((1, TD), lambda i, j: (0, j))],
                out_specs=pl.BlockSpec((TB, TD), lambda i, j: (i, j)),
                out_shape=jax.ShapeDtypeStruct((Bp, Dp), compute_dtype),
                compiler_params=pltpu.CompilerParams(
                    dimension_semantics=("parallel", "parallel"),
                    vmem_limit_bytes=vmem_limit),
                cost_estimate=dec_cost,
            )(dech, wd2, bd2)
            return jax.block_until_ready((recon_flat, mulv))

        try:
            recon_flat, mulv = run(True)
        except Exception:
            recon_flat, mulv = run(False)

    recon = recon_flat[:B, :D].astype(jnp.float32).reshape(B, C, H, W)
    mu = mulv[:B, :L]
    logvar = mulv[:B, Lp:Lp + L]
    return recon, mu, logvar


# ---------------------------------------------------------------------------
# Deterministic parameter construction (Linear weights stored transposed:
# (in_features, out_features)) and a pure-JAX reference for verification.
# ---------------------------------------------------------------------------
def init_params(key, input_dim, hidden_dim, latent_dim):
    h1 = hidden_dim
    h2 = int(hidden_dim * 0.7)
    h3 = hidden_dim // 2

    dims = [
        ("w1", (input_dim, h1)), ("b1", (1, h1)),
        ("w2", (h1, h2)),        ("b2", (1, h2)),
        ("w3", (h2, h3)),        ("b3", (1, h3)),
        ("wmu", (h3, latent_dim)), ("bmu", (1, latent_dim)),
        ("wlv", (h3, latent_dim)), ("blv", (1, latent_dim)),
        ("wd1", (latent_dim, h1)), ("bd1", (1, h1)),
        ("wd2", (h1, input_dim)),  ("bd2", (1, input_dim)),
    ]
    params = {}
    keys = jax.random.split(key, len(dims))
    for (name, shape), k in zip(dims, keys):
        fan_in = shape[0] if name.startswith("w") else shape[1]
        scale = 1.0 / np.sqrt(fan_in)
        params[name] = jax.random.uniform(k, shape, jnp.float32, -1.0, 1.0) * scale
    return params


def vae_forward_ref(x_nchw, eps, p, compute_dtype=jnp.bfloat16):
    """Pure-JAX reference mirroring the kernel's bf16-matmul / f32-accumulate math."""
    cdt = compute_dtype
    B = x_nchw.shape[0]
    x = x_nchw.reshape(B, -1)

    def dense(a, w, b):
        return jnp.dot(a.astype(cdt), w.astype(cdt),
                       preferred_element_type=jnp.float32) + b

    h = jax.nn.relu(dense(x, p["w1"], p["b1"]))
    h = jax.nn.relu(dense(h, p["w2"], p["b2"]))
    h = jax.nn.relu(dense(h, p["w3"], p["b3"]))
    mu = dense(h, p["wmu"], p["bmu"])
    logvar = dense(h, p["wlv"], p["blv"])
    z = mu + eps * jnp.exp(0.5 * logvar)
    d = jax.nn.relu(dense(z, p["wd1"], p["bd1"]))
    recon = jax.nn.sigmoid(dense(d, p["wd2"], p["bd2"]))
    return recon.reshape(x_nchw.shape), mu, logvar


if __name__ == "__main__":
    # Small shapes consistent with the module's forward:
    # batch=2, CHANNELS=4, IMG_SIZE=16, HIDDEN_DIM=64, LATENT_DIM=32
    B, C, IMG, HID, LAT = 2, 4, 16, 64, 32
    D = C * IMG * IMG

    key = jax.random.PRNGKey(0)
    k_x, k_eps, k_p = jax.random.split(key, 3)

    x = jax.random.uniform(k_x, (B, C, IMG, IMG), jnp.float32)   # image-like in [0,1)
    eps = jax.random.normal(k_eps, (B, LAT), jnp.float32)        # reparam noise
    params = init_params(k_p, D, HID, LAT)

    recon_r, mu_r, logvar_r = vae_forward_ref(x, eps, params)

    # recon tolerance reflects the bf16 recon output (+ EUP approx reciprocal);
    # mu/logvar are f32 outputs of bf16 matmuls and match tightly.
    REC_ATOL, LAT_ATOL = 1e-2, 2e-3

    # Path A: fused single kernel (all weights VMEM-resident) — default at this size.
    recon, mu, logvar = jax.block_until_ready(vae_forward(x, eps, params))
    assert recon.shape == (B, C, IMG, IMG)
    assert mu.shape == (B, LAT) and logvar.shape == (B, LAT)
    np.testing.assert_allclose(np.asarray(recon), np.asarray(recon_r), atol=REC_ATOL, rtol=0)
    np.testing.assert_allclose(np.asarray(mu), np.asarray(mu_r), atol=LAT_ATOL, rtol=LAT_ATOL)
    np.testing.assert_allclose(np.asarray(logvar), np.asarray(logvar_r), atol=LAT_ATOL, rtol=LAT_ATOL)

    # Path B: D-tiled two-kernel path (what realistic IMG_SIZE and v7x's 64 MiB VMEM
    # require) — forced here with a small d_tile so the path is exercised and verified.
    recon_t, mu_t, logvar_t = jax.block_until_ready(
        vae_forward(x, eps, params, force_tiled=True, d_tile=512))
    np.testing.assert_allclose(np.asarray(recon_t), np.asarray(recon_r), atol=REC_ATOL, rtol=0)
    np.testing.assert_allclose(np.asarray(mu_t), np.asarray(mu_r), atol=LAT_ATOL, rtol=LAT_ATOL)
    np.testing.assert_allclose(np.asarray(logvar_t), np.asarray(logvar_r), atol=LAT_ATOL, rtol=LAT_ATOL)

    print("KERNEL_OK")
</pallas_src>

<mosaic_0001>
module attributes {stable_mosaic.version = 11 : i64} {
  func.func @vae_fused_kernel(%arg0: i32, %arg1: memref<8x1024xbf16, #tpu.memory_space<vmem>>, %arg2: memref<8x128xf32, #tpu.memory_space<vmem>>, %arg3: memref<1024x64xbf16, #tpu.memory_space<vmem>>, %arg4: memref<1x64xf32, #tpu.memory_space<vmem>>, %arg5: memref<64x128xbf16, #tpu.memory_space<vmem>>, %arg6: memref<1x128xf32, #tpu.memory_space<vmem>>, %arg7: memref<128x32xbf16, #tpu.memory_space<vmem>>, %arg8: memref<1x32xf32, #tpu.memory_space<vmem>>, %arg9: memref<32x256xbf16, #tpu.memory_space<vmem>>, %arg10: memref<1x256xf32, #tpu.memory_space<vmem>>, %arg11: memref<128x64xbf16, #tpu.memory_space<vmem>>, %arg12: memref<1x64xf32, #tpu.memory_space<vmem>>, %arg13: memref<64x1024xbf16, #tpu.memory_space<vmem>>, %arg14: memref<1x1024xf32, #tpu.memory_space<vmem>>, %arg15: memref<8x1024xbf16, #tpu.memory_space<vmem>>, %arg16: memref<8x256xf32, #tpu.memory_space<vmem>>) attributes {dimension_semantics = [#tpu.dimension_semantics<parallel>], iteration_bounds = array<i64: 1>, scalar_prefetch = 0 : i64, scratch_operands = 0 : i64, tpu.core_type = #tpu.core_type<tc>, window_params = [{transform_indices = @transform_0, window_bounds = array<i64: 8, 1024>}, {transform_indices = @transform_1, window_bounds = array<i64: 8, 128>}, {pipeline_mode = #tpu.pipeline_mode<synchronous>, transform_indices = @transform_2, window_bounds = array<i64: 1024, 64>}, {pipeline_mode = #tpu.pipeline_mode<synchronous>, transform_indices = @transform_3, window_bounds = array<i64: 1, 64>}, {pipeline_mode = #tpu.pipeline_mode<synchronous>, transform_indices = @transform_4, window_bounds = array<i64: 64, 128>}, {pipeline_mode = #tpu.pipeline_mode<synchronous>, transform_indices = @transform_5, window_bounds = array<i64: 1, 128>}, {pipeline_mode = #tpu.pipeline_mode<synchronous>, transform_indices = @transform_6, window_bounds = array<i64: 128, 32>}, {pipeline_mode = #tpu.pipeline_mode<synchronous>, transform_indices = @transform_7, window_bounds = array<i64: 1, 32>}, {pipeline_mode = #tpu.pipeline_mode<synchronous>, transform_indices = @transform_8, window_bounds = array<i64: 32, 256>}, {pipeline_mode = #tpu.pipeline_mode<synchronous>, transform_indices = @transform_9, window_bounds = array<i64: 1, 256>}, {pipeline_mode = #tpu.pipeline_mode<synchronous>, transform_indices = @transform_10, window_bounds = array<i64: 128, 64>}, {pipeline_mode = #tpu.pipeline_mode<synchronous>, transform_indices = @transform_11, window_bounds = array<i64: 1, 64>}, {pipeline_mode = #tpu.pipeline_mode<synchronous>, transform_indices = @transform_12, window_bounds = array<i64: 64, 1024>}, {pipeline_mode = #tpu.pipeline_mode<synchronous>, transform_indices = @transform_13, window_bounds = array<i64: 1, 1024>}, {transform_indices = @transform_14, window_bounds = array<i64: 8, 1024>}, {transform_indices = @transform_15, window_bounds = array<i64: 8, 256>}]} {
    %c0 = arith.constant 0 : index
    %c0_0 = arith.constant 0 : index
    %0 = vector.load %arg1[%c0, %c0_0] : memref<8x1024xbf16, #tpu.memory_space<vmem>>, vector<8x1024xbf16>
    %c0_1 = arith.constant 0 : index
    %c0_2 = arith.constant 0 : index
    %1 = vector.load %arg3[%c0_1, %c0_2] : memref<1024x64xbf16, #tpu.memory_space<vmem>>, vector<1024x64xbf16>
    %cst = arith.constant dense<0.000000e+00> : vector<8x64xf32>
    %2 = tpu.matmul %0, %1, %cst {dimension_numbers = #tpu.dot_dimension_numbers<[1], [0], [0], [1], [0, 0, 1, 1], [], []>} : vector<8x1024xbf16>, vector<1024x64xbf16>, vector<8x64xf32> -> vector<8x64xf32>
    %c0_3 = arith.constant 0 : index
    %c0_4 = arith.constant 0 : index
    %3 = vector.load %arg4[%c0_3, %c0_4] : memref<1x64xf32, #tpu.memory_space<vmem>>, vector<1x64xf32>
    %4 = vector.broadcast %3 : vector<1x64xf32> to vector<8x64xf32>
    %5 = arith.addf %2, %4 : vector<8x64xf32>
    %cst_5 = arith.constant 0.000000e+00 : f32
    %6 = vector.broadcast %cst_5 : f32 to vector<8x64xf32>
    %7 = arith.maximumf %5, %6 : vector<8x64xf32>
    %8 = arith.truncf %7 : vector<8x64xf32> to vector<8x64xbf16>
    %c0_6 = arith.constant 0 : index
    %c0_7 = arith.constant 0 : index
    %9 = vector.load %arg5[%c0_6, %c0_7] : memref<64x128xbf16, #tpu.memory_space<vmem>>, vector<64x128xbf16>
    %cst_8 = arith.constant dense<0.000000e+00> : vector<8x128xf32>
    %10 = tpu.matmul %8, %9, %cst_8 {dimension_numbers = #tpu.dot_dimension_numbers<[1], [0], [0], [1], [0, 0, 1, 1], [], []>} : vector<8x64xbf16>, vector<64x128xbf16>, vector<8x128xf32> -> vector<8x128xf32>
    %c0_9 = arith.constant 0 : index
    %c0_10 = arith.constant 0 : index
    %11 = vector.load %arg6[%c0_9, %c0_10] : memref<1x128xf32, #tpu.memory_space<vmem>>, vector<1x128xf32>
    %12 = vector.broadcast %11 : vector<1x128xf32> to vector<8x128xf32>
    %13 = arith.addf %10, %12 : vector<8x128xf32>
    %cst_11 = arith.constant 0.000000e+00 : f32
    %14 = vector.broadcast %cst_11 : f32 to vector<8x128xf32>
    %15 = arith.maximumf %13, %14 : vector<8x128xf32>
    %16 = arith.truncf %15 : vector<8x128xf32> to vector<8x128xbf16>
    %c0_12 = arith.constant 0 : index
    %c0_13 = arith.constant 0 : index
    %17 = vector.load %arg7[%c0_12, %c0_13] : memref<128x32xbf16, #tpu.memory_space<vmem>>, vector<128x32xbf16>
    %cst_14 = arith.constant dense<0.000000e+00> : vector<8x32xf32>
    %18 = tpu.matmul %16, %17, %cst_14 {dimension_numbers = #tpu.dot_dimension_numbers<[1], [0], [0], [1], [0, 0, 1, 1], [], []>} : vector<8x128xbf16>, vector<128x32xbf16>, vector<8x32xf32> -> vector<8x32xf32>
    %c0_15 = arith.constant 0 : index
    %c0_16 = arith.constant 0 : index
    %19 = vector.load %arg8[%c0_15, %c0_16] : memref<1x32xf32, #tpu.memory_space<vmem>>, vector<1x32xf32>
    %20 = vector.broadcast %19 : vector<1x32xf32> to vector<8x32xf32>
    %21 = arith.addf %18, %20 : vector<8x32xf32>
    %cst_17 = arith.constant 0.000000e+00 : f32
    %22 = vector.broadcast %cst_17 : f32 to vector<8x32xf32>
    %23 = arith.maximumf %21, %22 : vector<8x32xf32>
    %24 = arith.truncf %23 : vector<8x32xf32> to vector<8x32xbf16>
    %c0_18 = arith.constant 0 : index
    %c0_19 = arith.constant 0 : index
    %25 = vector.load %arg9[%c0_18, %c0_19] : memref<32x256xbf16, #tpu.memory_space<vmem>>, vector<32x256xbf16>
    %cst_20 = arith.constant dense<0.000000e+00> : vector<8x256xf32>
    %26 = tpu.matmul %24, %25, %cst_20 {dimension_numbers = #tpu.dot_dimension_numbers<[1], [0], [0], [1], [0, 0, 1, 1], [], []>} : vector<8x32xbf16>, vector<32x256xbf16>, vector<8x256xf32> -> vector<8x256xf32>
    %c0_21 = arith.constant 0 : index
    %c0_22 = arith.constant 0 : index
    %27 = vector.load %arg10[%c0_21, %c0_22] : memref<1x256xf32, #tpu.memory_space<vmem>>, vector<1x256xf32>
    %28 = vector.broadcast %27 : vector<1x256xf32> to vector<8x256xf32>
    %29 = arith.addf %26, %28 : vector<8x256xf32>
    %30 = vector.extract_strided_slice %29 {offsets = [0, 0], sizes = [8, 128], strides = [1, 1]} : vector<8x256xf32> to vector<8x128xf32>
    %31 = vector.extract_strided_slice %29 {offsets = [0, 128], sizes = [8, 128], strides = [1, 1]} : vector<8x256xf32> to vector<8x128xf32>
    %c0_23 = arith.constant 0 : index
    %c0_24 = arith.constant 0 : index
    %32 = vector.load %arg2[%c0_23, %c0_24] : memref<8x128xf32, #tpu.memory_space<vmem>>, vector<8x128xf32>
    %cst_25 = arith.constant 5.000000e-01 : f32
    %33 = vector.broadcast %cst_25 : f32 to vector<8x128xf32>
    %34 = arith.mulf %33, %31 : vector<8x128xf32>
    %35 = math.exp %34 : vector<8x128xf32>
    %36 = arith.mulf %32, %35 : vector<8x128xf32>
    %37 = arith.addf %30, %36 : vector<8x128xf32>
    %38 = arith.truncf %37 : vector<8x128xf32> to vector<8x128xbf16>
    %c0_26 = arith.constant 0 : index
    %c0_27 = arith.constant 0 : index
    %39 = vector.load %arg11[%c0_26, %c0_27] : memref<128x64xbf16, #tpu.memory_space<vmem>>, vector<128x64xbf16>
    %cst_28 = arith.constant dense<0.000000e+00> : vector<8x64xf32>
    %40 = tpu.matmul %38, %39, %cst_28 {dimension_numbers = #tpu.dot_dimension_numbers<[1], [0], [0], [1], [0, 0, 1, 1], [], []>} : vector<8x128xbf16>, vector<128x64xbf16>, vector<8x64xf32> -> vector<8x64xf32>
    %c0_29 = arith.constant 0 : index
    %c0_30 = arith.constant 0 : index
    %41 = vector.load %arg12[%c0_29, %c0_30] : memref<1x64xf32, #tpu.memory_space<vmem>>, vector<1x64xf32>
    %42 = vector.broadcast %41 : vector<1x64xf32> to vector<8x64xf32>
    %43 = arith.addf %40, %42 : vector<8x64xf32>
    %cst_31 = arith.constant 0.000000e+00 : f32
    %44 = vector.broadcast %cst_31 : f32 to vector<8x64xf32>
    %45 = arith.maximumf %43, %44 : vector<8x64xf32>
    %46 = arith.truncf %45 : vector<8x64xf32> to vector<8x64xbf16>
    %c0_32 = arith.constant 0 : index
    %c0_33 = arith.constant 0 : index
    %47 = vector.load %arg13[%c0_32, %c0_33] : memref<64x1024xbf16, #tpu.memory_space<vmem>>, vector<64x1024xbf16>
    %cst_34 = arith.constant dense<0.000000e+00> : vector<8x1024xf32>
    %48 = tpu.matmul %46, %47, %cst_34 {dimension_numbers = #tpu.dot_dimension_numbers<[1], [0], [0], [1], [0, 0, 1, 1], [], []>} : vector<8x64xbf16>, vector<64x1024xbf16>, vector<8x1024xf32> -> vector<8x1024xf32>
    %c0_35 = arith.constant 0 : index
    %c0_36 = arith.constant 0 : index
    %49 = vector.load %arg14[%c0_35, %c0_36] : memref<1x1024xf32, #tpu.memory_space<vmem>>, vector<1x1024xf32>
    %50 = vector.broadcast %49 : vector<1x1024xf32> to vector<8x1024xf32>
    %51 = arith.addf %48, %50 : vector<8x1024xf32>
    %cst_37 = arith.constant 0.000000e+00 : f32
    %52 = vector.broadcast %cst_37 : f32 to vector<8x1024xf32>
    %53 = arith.subf %52, %51 : vector<8x1024xf32>
    %54 = math.exp %53 : vector<8x1024xf32>
    %cst_38 = arith.constant 1.000000e+00 : f32
    %55 = vector.broadcast %cst_38 : f32 to vector<8x1024xf32>
    %56 = arith.addf %55, %54 : vector<8x1024xf32>
    %57 = tpu.reciprocal %56 {approx = true} : vector<8x1024xf32> -> vector<8x1024xf32>
    %58 = arith.truncf %57 : vector<8x1024xf32> to vector<8x1024xbf16>
    %c0_39 = arith.constant 0 : index
    %c0_40 = arith.constant 0 : index
    %59 = vector.load %arg15[%c0_39, %c0_40] : memref<8x1024xbf16, #tpu.memory_space<vmem>>, vector<8x1024xbf16>
    tpu.vector_store %arg15[%c0_39, %c0_40], %58 {strides = array<i32>} : memref<8x1024xbf16, #tpu.memory_space<vmem>>, vector<8x1024xbf16>,
    %c0_41 = arith.constant 0 : index
    %c0_42 = arith.constant 0 : index
    %60 = vector.load %arg16[%c0_41, %c0_42] : memref<8x256xf32, #tpu.memory_space<vmem>>, vector<8x256xf32>
    tpu.vector_store %arg16[%c0_41, %c0_42], %29 {strides = array<i32>} : memref<8x256xf32, #tpu.memory_space<vmem>>, vector<8x256xf32>,
    return
  }
  func.func @transform_0(%arg0: i32) -> (i32, i32) {
    %c0_i32 = arith.constant 0 : i32
    %c0_i32_0 = arith.constant 0 : i32
    return %arg0, %c0_i32 : i32, i32
  }
  func.func @transform_1(%arg0: i32) -> (i32, i32) {
    %c0_i32 = arith.constant 0 : i32
    %c0_i32_0 = arith.constant 0 : i32
    return %arg0, %c0_i32 : i32, i32
  }
  func.func @transform_2(%arg0: i32) -> (i32, i32) {
    %c0_i32 = arith.constant 0 : i32
    %c0_i32_0 = arith.constant 0 : i32
    %c0_i32_1 = arith.constant 0 : i32
    return %c0_i32, %c0_i32_0 : i32, i32
  }
  func.func @transform_3(%arg0: i32) -> (i32, i32) {
    %c0_i32 = arith.constant 0 : i32
    %c0_i32_0 = arith.constant 0 : i32
    %c0_i32_1 = arith.constant 0 : i32
    return %c0_i32, %c0_i32_0 : i32, i32
  }
  func.func @transform_4(%arg0: i32) -> (i32, i32) {
    %c0_i32 = arith.constant 0 : i32
    %c0_i32_0 = arith.constant 0 : i32
    %c0_i32_1 = arith.constant 0 : i32
    return %c0_i32, %c0_i32_0 : i32, i32
  }
  func.func @transform_5(%arg0: i32) -> (i32, i32) {
    %c0_i32 = arith.constant 0 : i32
    %c0_i32_0 = arith.constant 0 : i32
    %c0_i32_1 = arith.constant 0 : i32
    return %c0_i32, %c0_i32_0 : i32, i32
  }
  func.func @transform_6(%arg0: i32) -> (i32, i32) {
    %c0_i32 = arith.constant 0 : i32
    %c0_i32_0 = arith.constant 0 : i32
    %c0_i32_1 = arith.constant 0 : i32
    return %c0_i32, %c0_i32_0 : i32, i32
  }
  func.func @transform_7(%arg0: i32) -> (i32, i32) {
    %c0_i32 = arith.constant 0 : i32
    %c0_i32_0 = arith.constant 0 : i32
    %c0_i32_1 = arith.constant 0 : i32
    return %c0_i32, %c0_i32_0 : i32, i32
  }
  func.func @transform_8(%arg0: i32) -> (i32, i32) {
    %c0_i32 = arith.constant 0 : i32
    %c0_i32_0 = arith.constant 0 : i32
    %c0_i32_1 = arith.constant 0 : i32
    return %c0_i32, %c0_i32_0 : i32, i32
  }
  func.func @transform_9(%arg0: i32) -> (i32, i32) {
    %c0_i32 = arith.constant 0 : i32
    %c0_i32_0 = arith.constant 0 : i32
    %c0_i32_1 = arith.constant 0 : i32
    return %c0_i32, %c0_i32_0 : i32, i32
  }
  func.func @transform_10(%arg0: i32) -> (i32, i32) {
    %c0_i32 = arith.constant 0 : i32
    %c0_i32_0 = arith.constant 0 : i32
    %c0_i32_1 = arith.constant 0 : i32
    return %c0_i32, %c0_i32_0 : i32, i32
  }
  func.func @transform_11(%arg0: i32) -> (i32, i32) {
    %c0_i32 = arith.constant 0 : i32
    %c0_i32_0 = arith.constant 0 : i32
    %c0_i32_1 = arith.constant 0 : i32
    return %c0_i32, %c0_i32_0 : i32, i32
  }
  func.func @transform_12(%arg0: i32) -> (i32, i32) {
    %c0_i32 = arith.constant 0 : i32
    %c0_i32_0 = arith.constant 0 : i32
    %c0_i32_1 = arith.constant 0 : i32
    return %c0_i32, %c0_i32_0 : i32, i32
  }
  func.func @transform_13(%arg0: i32) -> (i32, i32) {
    %c0_i32 = arith.constant 0 : i32
    %c0_i32_0 = arith.constant 0 : i32
    %c0_i32_1 = arith.constant 0 : i32
    return %c0_i32, %c0_i32_0 : i32, i32
  }
  func.func @transform_14(%arg0: i32) -> (i32, i32) {
    %c0_i32 = arith.constant 0 : i32
    %c0_i32_0 = arith.constant 0 : i32
    return %arg0, %c0_i32 : i32, i32
  }
  func.func @transform_15(%arg0: i32) -> (i32, i32) {
    %c0_i32 = arith.constant 0 : i32
    %c0_i32_0 = arith.constant 0 : i32
    return %arg0, %c0_i32 : i32, i32
  }
}

module attributes {stable_mosaic.version = 11 : i64} {
  func.func @vae_fused_kernel(%arg0: i32, %arg1: memref<8x1024xbf16, #tpu.memory_space<vmem>>, %arg2: memref<8x128xf32, #tpu.memory_space<vmem>>, %arg3: memref<1024x64xbf16, #tpu.memory_space<vmem>>, %arg4: memref<1x64xf32, #tpu.memory_space<vmem>>, %arg5: memref<64x128xbf16, #tpu.memory_space<vmem>>, %arg6: memref<1x128xf32, #tpu.memory_space<vmem>>, %arg7: memref<128x32xbf16, #tpu.memory_space<vmem>>, %arg8: memref<1x32xf32, #tpu.memory_space<vmem>>, %arg9: memref<32x256xbf16, #tpu.memory_space<vmem>>, %arg10: memref<1x256xf32, #tpu.memory_space<vmem>>, %arg11: memref<128x64xbf16, #tpu.memory_space<vmem>>, %arg12: memref<1x64xf32, #tpu.memory_space<vmem>>, %arg13: memref<64x1024xbf16, #tpu.memory_space<vmem>>, %arg14: memref<1x1024xf32, #tpu.memory_space<vmem>>, %arg15: memref<8x1024xbf16, #tpu.memory_space<vmem>>, %arg16: memref<8x256xf32, #tpu.memory_space<vmem>>) attributes {dimension_semantics = [#tpu.dimension_semantics<parallel>], iteration_bounds = array<i64: 1>, scalar_prefetch = 0 : i64, scratch_operands = 0 : i64, tpu.core_type = #tpu.core_type<tc>, window_params = [{transform_indices = @transform_0, window_bounds = array<i64: 8, 1024>}, {transform_indices = @transform_1, window_bounds = array<i64: 8, 128>}, {pipeline_mode = #tpu.pipeline_mode<synchronous>, transform_indices = @transform_2, window_bounds = array<i64: 1024, 64>}, {pipeline_mode = #tpu.pipeline_mode<synchronous>, transform_indices = @transform_3, window_bounds = array<i64: 1, 64>}, {pipeline_mode = #tpu.pipeline_mode<synchronous>, transform_indices = @transform_4, window_bounds = array<i64: 64, 128>}, {pipeline_mode = #tpu.pipeline_mode<synchronous>, transform_indices = @transform_5, window_bounds = array<i64: 1, 128>}, {pipeline_mode = #tpu.pipeline_mode<synchronous>, transform_indices = @transform_6, window_bounds = array<i64: 128, 32>}, {pipeline_mode = #tpu.pipeline_mode<synchronous>, transform_indices = @transform_7, window_bounds = array<i64: 1, 32>}, {pipeline_mode = #tpu.pipeline_mode<synchronous>, transform_indices = @transform_8, window_bounds = array<i64: 32, 256>}, {pipeline_mode = #tpu.pipeline_mode<synchronous>, transform_indices = @transform_9, window_bounds = array<i64: 1, 256>}, {pipeline_mode = #tpu.pipeline_mode<synchronous>, transform_indices = @transform_10, window_bounds = array<i64: 128, 64>}, {pipeline_mode = #tpu.pipeline_mode<synchronous>, transform_indices = @transform_11, window_bounds = array<i64: 1, 64>}, {pipeline_mode = #tpu.pipeline_mode<synchronous>, transform_indices = @transform_12, window_bounds = array<i64: 64, 1024>}, {pipeline_mode = #tpu.pipeline_mode<synchronous>, transform_indices = @transform_13, window_bounds = array<i64: 1, 1024>}, {transform_indices = @transform_14, window_bounds = array<i64: 8, 1024>}, {transform_indices = @transform_15, window_bounds = array<i64: 8, 256>}]} {
    %c0 = arith.constant 0 : index
    %c0_0 = arith.constant 0 : index
    %0 = vector.load %arg1[%c0, %c0_0] : memref<8x1024xbf16, #tpu.memory_space<vmem>>, vector<8x1024xbf16>
    %c0_1 = arith.constant 0 : index
    %c0_2 = arith.constant 0 : index
    %1 = vector.load %arg3[%c0_1, %c0_2] : memref<1024x64xbf16, #tpu.memory_space<vmem>>, vector<1024x64xbf16>
    %cst = arith.constant dense<0.000000e+00> : vector<8x64xf32>
    %2 = tpu.matmul %0, %1, %cst {dimension_numbers = #tpu.dot_dimension_numbers<[1], [0], [0], [1], [0, 0, 1, 1], [], []>} : vector<8x1024xbf16>, vector<1024x64xbf16>, vector<8x64xf32> -> vector<8x64xf32>
    %c0_3 = arith.constant 0 : index
    %c0_4 = arith.constant 0 : index
    %3 = vector.load %arg4[%c0_3, %c0_4] : memref<1x64xf32, #tpu.memory_space<vmem>>, vector<1x64xf32>
    %4 = vector.broadcast %3 : vector<1x64xf32> to vector<8x64xf32>
    %5 = arith.addf %2, %4 : vector<8x64xf32>
    %cst_5 = arith.constant 0.000000e+00 : f32
    %6 = vector.broadcast %cst_5 : f32 to vector<8x64xf32>
    %7 = arith.maximumf %5, %6 : vector<8x64xf32>
    %8 = arith.truncf %7 : vector<8x64xf32> to vector<8x64xbf16>
    %c0_6 = arith.constant 0 : index
    %c0_7 = arith.constant 0 : index
    %9 = vector.load %arg5[%c0_6, %c0_7] : memref<64x128xbf16, #tpu.memory_space<vmem>>, vector<64x128xbf16>
    %cst_8 = arith.constant dense<0.000000e+00> : vector<8x128xf32>
    %10 = tpu.matmul %8, %9, %cst_8 {dimension_numbers = #tpu.dot_dimension_numbers<[1], [0], [0], [1], [0, 0, 1, 1], [], []>} : vector<8x64xbf16>, vector<64x128xbf16>, vector<8x128xf32> -> vector<8x128xf32>
    %c0_9 = arith.constant 0 : index
    %c0_10 = arith.constant 0 : index
    %11 = vector.load %arg6[%c0_9, %c0_10] : memref<1x128xf32, #tpu.memory_space<vmem>>, vector<1x128xf32>
    %12 = vector.broadcast %11 : vector<1x128xf32> to vector<8x128xf32>
    %13 = arith.addf %10, %12 : vector<8x128xf32>
    %cst_11 = arith.constant 0.000000e+00 : f32
    %14 = vector.broadcast %cst_11 : f32 to vector<8x128xf32>
    %15 = arith.maximumf %13, %14 : vector<8x128xf32>
    %16 = arith.truncf %15 : vector<8x128xf32> to vector<8x128xbf16>
    %c0_12 = arith.constant 0 : index
    %c0_13 = arith.constant 0 : index
    %17 = vector.load %arg7[%c0_12, %c0_13] : memref<128x32xbf16, #tpu.memory_space<vmem>>, vector<128x32xbf16>
    %cst_14 = arith.constant dense<0.000000e+00> : vector<8x32xf32>
    %18 = tpu.matmul %16, %17, %cst_14 {dimension_numbers = #tpu.dot_dimension_numbers<[1], [0], [0], [1], [0, 0, 1, 1], [], []>} : vector<8x128xbf16>, vector<128x32xbf16>, vector<8x32xf32> -> vector<8x32xf32>
    %c0_15 = arith.constant 0 : index
    %c0_16 = arith.constant 0 : index
    %19 = vector.load %arg8[%c0_15, %c0_16] : memref<1x32xf32, #tpu.memory_space<vmem>>, vector<1x32xf32>
    %20 = vector.broadcast %19 : vector<1x32xf32> to vector<8x32xf32>
    %21 = arith.addf %18, %20 : vector<8x32xf32>
    %cst_17 = arith.constant 0.000000e+00 : f32
    %22 = vector.broadcast %cst_17 : f32 to vector<8x32xf32>
    %23 = arith.maximumf %21, %22 : vector<8x32xf32>
    %24 = arith.truncf %23 : vector<8x32xf32> to vector<8x32xbf16>
    %c0_18 = arith.constant 0 : index
    %c0_19 = arith.constant 0 : index
    %25 = vector.load %arg9[%c0_18, %c0_19] : memref<32x256xbf16, #tpu.memory_space<vmem>>, vector<32x256xbf16>
    %cst_20 = arith.constant dense<0.000000e+00> : vector<8x256xf32>
    %26 = tpu.matmul %24, %25, %cst_20 {dimension_numbers = #tpu.dot_dimension_numbers<[1], [0], [0], [1], [0, 0, 1, 1], [], []>} : vector<8x32xbf16>, vector<32x256xbf16>, vector<8x256xf32> -> vector<8x256xf32>
    %c0_21 = arith.constant 0 : index
    %c0_22 = arith.constant 0 : index
    %27 = vector.load %arg10[%c0_21, %c0_22] : memref<1x256xf32, #tpu.memory_space<vmem>>, vector<1x256xf32>
    %28 = vector.broadcast %27 : vector<1x256xf32> to vector<8x256xf32>
    %29 = arith.addf %26, %28 : vector<8x256xf32>
    %30 = vector.extract_strided_slice %29 {offsets = [0, 0], sizes = [8, 128], strides = [1, 1]} : vector<8x256xf32> to vector<8x128xf32>
    %31 = vector.extract_strided_slice %29 {offsets = [0, 128], sizes = [8, 128], strides = [1, 1]} : vector<8x256xf32> to vector<8x128xf32>
    %c0_23 = arith.constant 0 : index
    %c0_24 = arith.constant 0 : index
    %32 = vector.load %arg2[%c0_23, %c0_24] : memref<8x128xf32, #tpu.memory_space<vmem>>, vector<8x128xf32>
    %cst_25 = arith.constant 5.000000e-01 : f32
    %33 = vector.broadcast %cst_25 : f32 to vector<8x128xf32>
    %34 = arith.mulf %33, %31 : vector<8x128xf32>
    %35 = math.exp %34 : vector<8x128xf32>
    %36 = arith.mulf %32, %35 : vector<8x128xf32>
    %37 = arith.addf %30, %36 : vector<8x128xf32>
    %38 = arith.truncf %37 : vector<8x128xf32> to vector<8x128xbf16>
    %c0_26 = arith.constant 0 : index
    %c0_27 = arith.constant 0 : index
    %39 = vector.load %arg11[%c0_26, %c0_27] : memref<128x64xbf16, #tpu.memory_space<vmem>>, vector<128x64xbf16>
    %cst_28 = arith.constant dense<0.000000e+00> : vector<8x64xf32>
    %40 = tpu.matmul %38, %39, %cst_28 {dimension_numbers = #tpu.dot_dimension_numbers<[1], [0], [0], [1], [0, 0, 1, 1], [], []>} : vector<8x128xbf16>, vector<128x64xbf16>, vector<8x64xf32> -> vector<8x64xf32>
    %c0_29 = arith.constant 0 : index
    %c0_30 = arith.constant 0 : index
    %41 = vector.load %arg12[%c0_29, %c0_30] : memref<1x64xf32, #tpu.memory_space<vmem>>, vector<1x64xf32>
    %42 = vector.broadcast %41 : vector<1x64xf32> to vector<8x64xf32>
    %43 = arith.addf %40, %42 : vector<8x64xf32>
    %cst_31 = arith.constant 0.000000e+00 : f32
    %44 = vector.broadcast %cst_31 : f32 to vector<8x64xf32>
    %45 = arith.maximumf %43, %44 : vector<8x64xf32>
    %46 = arith.truncf %45 : vector<8x64xf32> to vector<8x64xbf16>
    %c0_32 = arith.constant 0 : index
    %c0_33 = arith.constant 0 : index
    %47 = vector.load %arg13[%c0_32, %c0_33] : memref<64x1024xbf16, #tpu.memory_space<vmem>>, vector<64x1024xbf16>
    %cst_34 = arith.constant dense<0.000000e+00> : vector<8x1024xf32>
    %48 = tpu.matmul %46, %47, %cst_34 {dimension_numbers = #tpu.dot_dimension_numbers<[1], [0], [0], [1], [0, 0, 1, 1], [], []>} : vector<8x64xbf16>, vector<64x1024xbf16>, vector<8x1024xf32> -> vector<8x1024xf32>
    %c0_35 = arith.constant 0 : index
    %c0_36 = arith.constant 0 : index
    %49 = vector.load %arg14[%c0_35, %c0_36] : memref<1x1024xf32, #tpu.memory_space<vmem>>, vector<1x1024xf32>
    %50 = vector.broadcast %49 : vector<1x1024xf32> to vector<8x1024xf32>
    %51 = arith.addf %48, %50 : vector<8x1024xf32>
    %cst_37 = arith.constant 0.000000e+00 : f32
    %52 = vector.broadcast %cst_37 : f32 to vector<8x1024xf32>
    %53 = arith.subf %52, %51 : vector<8x1024xf32>
    %54 = math.exp %53 : vector<8x1024xf32>
    %cst_38 = arith.constant 1.000000e+00 : f32
    %55 = vector.broadcast %cst_38 : f32 to vector<8x1024xf32>
    %56 = arith.addf %55, %54 : vector<8x1024xf32>
    %57 = tpu.reciprocal %56 {approx = true} : vector<8x1024xf32> -> vector<8x1024xf32>
    %58 = arith.truncf %57 : vector<8x1024xf32> to vector<8x1024xbf16>
    %c0_39 = arith.constant 0 : index
    %c0_40 = arith.constant 0 : index
    %59 = vector.load %arg15[%c0_39, %c0_40] : memref<8x1024xbf16, #tpu.memory_space<vmem>>, vector<8x1024xbf16>
    tpu.vector_store %arg15[%c0_39, %c0_40], %58 {strides = array<i32>} : memref<8x1024xbf16, #tpu.memory_space<vmem>>, vector<8x1024xbf16>,
    %c0_41 = arith.constant 0 : index
    %c0_42 = arith.constant 0 : index
    %60 = vector.load %arg16[%c0_41, %c0_42] : memref<8x256xf32, #tpu.memory_space<vmem>>, vector<8x256xf32>
    tpu.vector_store %arg16[%c0_41, %c0_42], %29 {strides = array<i32>} : memref<8x256xf32, #tpu.memory_space<vmem>>, vector<8x256xf32>,
    return
  }
  func.func @transform_0(%arg0: i32) -> (i32, i32) {
    %c0_i32 = arith.constant 0 : i32
    %c0_i32_0 = arith.constant 0 : i32
    return %arg0, %c0_i32 : i32, i32
  }
  func.func @transform_1(%arg0: i32) -> (i32, i32) {
    %c0_i32 = arith.constant 0 : i32
    %c0_i32_0 = arith.constant 0 : i32
    return %arg0, %c0_i32 : i32, i32
  }
  func.func @transform_2(%arg0: i32) -> (i32, i32) {
    %c0_i32 = arith.constant 0 : i32
    %c0_i32_0 = arith.constant 0 : i32
    %c0_i32_1 = arith.constant 0 : i32
    return %c0_i32, %c0_i32_0 : i32, i32
  }
  func.func @transform_3(%arg0: i32) -> (i32, i32) {
    %c0_i32 = arith.constant 0 : i32
    %c0_i32_0 = arith.constant 0 : i32
    %c0_i32_1 = arith.constant 0 : i32
    return %c0_i32, %c0_i32_0 : i32, i32
  }
  func.func @transform_4(%arg0: i32) -> (i32, i32) {
    %c0_i32 = arith.constant 0 : i32
    %c0_i32_0 = arith.constant 0 : i32
    %c0_i32_1 = arith.constant 0 : i32
    return %c0_i32, %c0_i32_0 : i32, i32
  }
  func.func @transform_5(%arg0: i32) -> (i32, i32) {
    %c0_i32 = arith.constant 0 : i32
    %c0_i32_0 = arith.constant 0 : i32
    %c0_i32_1 = arith.constant 0 : i32
    return %c0_i32, %c0_i32_0 : i32, i32
  }
  func.func @transform_6(%arg0: i32) -> (i32, i32) {
    %c0_i32 = arith.constant 0 : i32
    %c0_i32_0 = arith.constant 0 : i32
    %c0_i32_1 = arith.constant 0 : i32
    return %c0_i32, %c0_i32_0 : i32, i32
  }
  func.func @transform_7(%arg0: i32) -> (i32, i32) {
    %c0_i32 = arith.constant 0 : i32
    %c0_i32_0 = arith.constant 0 : i32
    %c0_i32_1 = arith.constant 0 : i32
    return %c0_i32, %c0_i32_0 : i32, i32
  }
  func.func @transform_8(%arg0: i32) -> (i32, i32) {
    %c0_i32 = arith.constant 0 : i32
    %c0_i32_0 = arith.constant 0 : i32
    %c0_i32_1 = arith.constant 0 : i32
    return %c0_i32, %c0_i32_0 : i32, i32
  }
  func.func @transform_9(%arg0: i32) -> (i32, i32) {
    %c0_i32 = arith.constant 0 : i32
    %c0_i32_0 = arith.constant 0 : i32
    %c0_i32_1 = arith.constant 0 : i32
    return %c0_i32, %c0_i32_0 : i32, i32
  }
  func.func @transform_10(%arg0: i32) -> (i32, i32) {
    %c0_i32 = arith.constant 0 : i32
    %c0_i32_0 = arith.constant 0 : i32
    %c0_i32_1 = arith.constant 0 : i32
    return %c0_i32, %c0_i32_0 : i32, i32
  }
  func.func @transform_11(%arg0: i32) -> (i32, i32) {
    %c0_i32 = arith.constant 0 : i32
    %c0_i32_0 = arith.constant 0 : i32
    %c0_i32_1 = arith.constant 0 : i32
    return %c0_i32, %c0_i32_0 : i32, i32
  }
  func.func @transform_12(%arg0: i32) -> (i32, i32) {
    %c0_i32 = arith.constant 0 : i32
    %c0_i32_0 = arith.constant 0 : i32
    %c0_i32_1 = arith.constant 0 : i32
    return %c0_i32, %c0_i32_0 : i32, i32
  }
  func.func @transform_13(%arg0: i32) -> (i32, i32) {
    %c0_i32 = arith.constant 0 : i32
    %c0_i32_0 = arith.constant 0 : i32
    %c0_i32_1 = arith.constant 0 : i32
    return %c0_i32, %c0_i32_0 : i32, i32
  }
  func.func @transform_14(%arg0: i32) -> (i32, i32) {
    %c0_i32 = arith.constant 0 : i32
    %c0_i32_0 = arith.constant 0 : i32
    return %arg0, %c0_i32 : i32, i32
  }
  func.func @transform_15(%arg0: i32) -> (i32, i32) {
    %c0_i32 = arith.constant 0 : i32
    %c0_i32_0 = arith.constant 0 : i32
    return %arg0, %c0_i32 : i32, i32
  }
}

</mosaic_0001>

<llo_original>
// kernel: tpu_custom_call.1
$region0: #{tpu_custom_call.1}
  #allocation0 [shape = 'u32[]', space=smem, size = 0x4, offset = 0x4, fixed_abs, tag = 'smem constant byte address 0x4 - core index']
  #allocation1 [shape = 'u32[72,128]{1,0:T(1,128)}', space=vmem, size = 0x9000, scoped, tag = 'internal scratch']
  %s0 = inlined_call_operand.vmem [shape: bf16[8,1024], index: 0, kind: input, shape index: {}]
  %s1 = inlined_call_operand.vmem [shape: f32[8,128], index: 1, kind: input, shape index: {}]
  %s2 = inlined_call_operand.vmem [shape: bf16[1024,64], index: 2, kind: input, shape index: {}]
  %s3 = inlined_call_operand.vmem [shape: f32[1,64], index: 3, kind: input, shape index: {}]
  %s4 = inlined_call_operand.vmem [shape: bf16[64,128], index: 4, kind: input, shape index: {}]
  %s5 = inlined_call_operand.vmem [shape: f32[1,128], index: 5, kind: input, shape index: {}]
  %s6 = inlined_call_operand.vmem [shape: bf16[128,32], index: 6, kind: input, shape index: {}]
  %s7 = inlined_call_operand.vmem [shape: f32[1,32], index: 7, kind: input, shape index: {}]
  %s8 = inlined_call_operand.vmem [shape: bf16[32,256], index: 8, kind: input, shape index: {}]
  %s9 = inlined_call_operand.vmem [shape: f32[1,256], index: 9, kind: input, shape index: {}]
  %s10 = inlined_call_operand.vmem [shape: bf16[128,64], index: 10, kind: input, shape index: {}]
  %s11 = inlined_call_operand.vmem [shape: f32[1,64], index: 11, kind: input, shape index: {}]
  %s12 = inlined_call_operand.vmem [shape: bf16[64,1024], index: 12, kind: input, shape index: {}]
  %s13 = inlined_call_operand.vmem [shape: f32[1,1024], index: 13, kind: input, shape index: {}]
  %s14 = inlined_call_operand.hbm [shape: bf16[8,1024], index: 14, kind: output, shape index: {0}]
  %s15 = inlined_call_operand.hbm [shape: f32[8,256], index: 15, kind: output, shape index: {1}]
  %16 = xla_tuple %s14, %s15
  %s17 = sld [smem:[#allocation0]]
  $region74: #{tpu_custom_call.1} parent=0
    _
  %s19 = ssub.s32 1, %s17
  %s20 = scalar_select 0, %s19, %s17
  $region1: #{tpu_custom_call.1} parent=0
    #allocation2 [shape = 'u8[16384]{0}', space=vmem, size = 0x4000, scoped, tag = 'output window, operand 0, single buffered']
    #allocation3 [shape = 's32[1]{0}', space=sflag, size = 0x4, scoped, tag = 'scoped memory for tpu_custom_call.1']
    #allocation4 [shape = 'u8[8192]{0}', space=vmem, size = 0x2000, scoped, tag = 'output window, operand 1, single buffered']
    #allocation5 [shape = 's32[1]{0}', space=sflag, size = 0x4, scoped, tag = 'scoped memory for tpu_custom_call.1']
    %21 = vsyncpa [#allocation3], 0
    %22 = vsyncpa [#allocation5], 0
    // Predicated region
    $region2: #{tpu_custom_call.1} parent=1 // pred_check
      _
    $region3: #{tpu_custom_call.1} parent=1 // pred_check_branch
      %24 = sbr.rel (0) target = $region5
    $region4: #{tpu_custom_call.1} parent=1 // pred_region
      _
    $region5: #{tpu_custom_call.1} parent=1 // pred_fallthru
      _
    // Predicated region
    $region6: #{tpu_custom_call.1} parent=1 // pred_check
      _
    $region7: #{tpu_custom_call.1} parent=1 // pred_check_branch
      %26 = sbr.rel (0) target = $region9
    $region8: #{tpu_custom_call.1} parent=1 // pred_region
      _
    $region9: #{tpu_custom_call.1} parent=1 // pred_fallthru
      _
    // Predicated region
    $region10: #{tpu_custom_call.1} parent=1 // pred_check
      _
    $region11: #{tpu_custom_call.1} parent=1 // pred_check_branch
      %28 = sbr.rel (0) target = $region13
    $region12: #{tpu_custom_call.1} parent=1 // pred_region
      _
    $region13: #{tpu_custom_call.1} parent=1 // pred_fallthru
      _
    // Predicated region
    $region14: #{tpu_custom_call.1} parent=1 // pred_check
      _
    $region15: #{tpu_custom_call.1} parent=1 // pred_check_branch
      %30 = sbr.rel (0) target = $region17
    $region16: #{tpu_custom_call.1} parent=1 // pred_region
      _
    $region17: #{tpu_custom_call.1} parent=1 // pred_fallthru
      _
    // Predicated region
    $region18: #{tpu_custom_call.1} parent=1 // pred_check
      _
    $region19: #{tpu_custom_call.1} parent=1 // pred_check_branch
      %32 = sbr.rel (0) target = $region21
    $region20: #{tpu_custom_call.1} parent=1 // pred_region
      _
    $region21: #{tpu_custom_call.1} parent=1 // pred_fallthru
      _
    // Predicated region
    $region22: #{tpu_custom_call.1} parent=1 // pred_check
      _
    $region23: #{tpu_custom_call.1} parent=1 // pred_check_branch
      %34 = sbr.rel (0) target = $region25
    $region24: #{tpu_custom_call.1} parent=1 // pred_region
      _
    $region25: #{tpu_custom_call.1} parent=1 // pred_fallthru
      _
    // Predicated region
    $region26: #{tpu_custom_call.1} parent=1 // pred_check
      _
    $region27: #{tpu_custom_call.1} parent=1 // pred_check_branch
      %36 = sbr.rel (0) target = $region29
    $region28: #{tpu_custom_call.1} parent=1 // pred_region
      _
    $region29: #{tpu_custom_call.1} parent=1 // pred_fallthru
      _
    // Predicated region
    $region30: #{tpu_custom_call.1} parent=1 // pred_check
      _
    $region31: #{tpu_custom_call.1} parent=1 // pred_check_branch
      %38 = sbr.rel (0) target = $region33
    $region32: #{tpu_custom_call.1} parent=1 // pred_region
      _
    $region33: #{tpu_custom_call.1} parent=1 // pred_fallthru
      _
    // Predicated region
    $region34: #{tpu_custom_call.1} parent=1 // pred_check
      _
    $region35: #{tpu_custom_call.1} parent=1 // pred_check_branch
      %40 = sbr.rel (0) target = $region37
    $region36: #{tpu_custom_call.1} parent=1 // pred_region
      _
    $region37: #{tpu_custom_call.1} parent=1 // pred_fallthru
      _
    // Predicated region
    $region38: #{tpu_custom_call.1} parent=1 // pred_check
      _
    $region39: #{tpu_custom_call.1} parent=1 // pred_check_branch
      %42 = sbr.rel (0) target = $region41
    $region40: #{tpu_custom_call.1} parent=1 // pred_region
      _
    $region41: #{tpu_custom_call.1} parent=1 // pred_fallthru
      _
    // Predicated region
    $region42: #{tpu_custom_call.1} parent=1 // pred_check
      _
    $region43: #{tpu_custom_call.1} parent=1 // pred_check_branch
      %44 = sbr.rel (0) target = $region45
    $region44: #{tpu_custom_call.1} parent=1 // pred_region
      _
    $region45: #{tpu_custom_call.1} parent=1 // pred_fallthru
      _
    // Predicated region
    $region46: #{tpu_custom_call.1} parent=1 // pred_check
      _
    $region47: #{tpu_custom_call.1} parent=1 // pred_check_branch
      %46 = sbr.rel (0) target = $region49
    $region48: #{tpu_custom_call.1} parent=1 // pred_region
      _
    $region49: #{tpu_custom_call.1} parent=1 // pred_fallthru
      _
    // Predicated region
    $region50: #{tpu_custom_call.1} parent=1 // pred_check
      _
    $region51: #{tpu_custom_call.1} parent=1 // pred_check_branch
      %48 = sbr.rel (0) target = $region53
    $region52: #{tpu_custom_call.1} parent=1 // pred_region
      _
    $region53: #{tpu_custom_call.1} parent=1 // pred_fallthru
      _
    // Predicated region
    $region54: #{tpu_custom_call.1} parent=1 // pred_check
      _
    $region55: #{tpu_custom_call.1} parent=1 // pred_check_branch
      %50 = sbr.rel (0) target = $region57
    $region56: #{tpu_custom_call.1} parent=1 // pred_region
      _
    $region57: #{tpu_custom_call.1} parent=1 // pred_fallthru
      _
    %v52 = vld [vmem:[%s0] sm:$0xff]
    %v53 = vld [vmem:[%s0 + $0x8] sm:$0xff]
    %v54 = vld [vmem:[%s0 + $0x10] sm:$0xff]
    %v55 = vld [vmem:[%s0 + $0x18] sm:$0xff]
    %v56 = vld [vmem:[%s2] sm:$0xf]
    %v57 = vld [vmem:[%s2 + $0x4] sm:$0xf]
    %v58 = vld [vmem:[%s2 + $0x8] sm:$0xf]
    %v59 = vld [vmem:[%s2 + $0xc] sm:$0xf]
    %v60 = vld [vmem:[%s2 + $0x10] sm:$0xf]
    %v61 = vld [vmem:[%s2 + $0x14] sm:$0xf]
    %v62 = vld [vmem:[%s2 + $0x18] sm:$0xf]
    %v63 = vld [vmem:[%s2 + $0x1c] sm:$0xf]
    %v64 = vld [vmem:[%s2 + $0x20] sm:$0xf]
    %v65 = vld [vmem:[%s2 + $0x24] sm:$0xf]
    %v66 = vld [vmem:[%s2 + $0x28] sm:$0xf]
    %v67 = vld [vmem:[%s2 + $0x2c] sm:$0xf]
    %v68 = vld [vmem:[%s2 + $0x30] sm:$0xf]
    %v69 = vld [vmem:[%s2 + $0x34] sm:$0xf]
    %v70 = vld [vmem:[%s2 + $0x38] sm:$0xf]
    %v71 = vld [vmem:[%s2 + $0x3c] sm:$0xf]
    %v72 = vld [vmem:[%s2 + $0x40] sm:$0xf]
    %v73 = vld [vmem:[%s2 + $0x44] sm:$0xf]
    %v74 = vld [vmem:[%s2 + $0x48] sm:$0xf]
    %v75 = vld [vmem:[%s2 + $0x4c] sm:$0xf]
    %v76 = vld [vmem:[%s2 + $0x50] sm:$0xf]
    %v77 = vld [vmem:[%s2 + $0x54] sm:$0xf]
    %v78 = vld [vmem:[%s2 + $0x58] sm:$0xf]
    %v79 = vld [vmem:[%s2 + $0x5c] sm:$0xf]
    %v80 = vld [vmem:[%s2 + $0x60] sm:$0xf]
    %v81 = vld [vmem:[%s2 + $0x64] sm:$0xf]
    %v82 = vld [vmem:[%s2 + $0x68] sm:$0xf]
    %v83 = vld [vmem:[%s2 + $0x6c] sm:$0xf]
    %v84 = vld [vmem:[%s2 + $0x70] sm:$0xf]
    %v85 = vld [vmem:[%s2 + $0x74] sm:$0xf]
    %v86 = vld [vmem:[%s2 + $0x78] sm:$0xf]
    %v87 = vld [vmem:[%s2 + $0x7c] sm:$0xf]
    %v88 = vld [vmem:[%s2 + $0x80] sm:$0xf]
    %v89 = vld [vmem:[%s2 + $0x84] sm:$0xf]
    %v90 = vld [vmem:[%s2 + $0x88] sm:$0xf]
    %v91 = vld [vmem:[%s2 + $0x8c] sm:$0xf]
    %v92 = vld [vmem:[%s2 + $0x90] sm:$0xf]
    %v93 = vld [vmem:[%s2 + $0x94] sm:$0xf]
    %v94 = vld [vmem:[%s2 + $0x98] sm:$0xf]
    %v95 = vld [vmem:[%s2 + $0x9c] sm:$0xf]
    %v96 = vld [vmem:[%s2 + $0xa0] sm:$0xf]
    %v97 = vld [vmem:[%s2 + $0xa4] sm:$0xf]
    %v98 = vld [vmem:[%s2 + $0xa8] sm:$0xf]
    %v99 = vld [vmem:[%s2 + $0xac] sm:$0xf]
    %v100 = vld [vmem:[%s2 + $0xb0] sm:$0xf]
    %v101 = vld [vmem:[%s2 + $0xb4] sm:$0xf]
    %v102 = vld [vmem:[%s2 + $0xb8] sm:$0xf]
    %v103 = vld [vmem:[%s2 + $0xbc] sm:$0xf]
    %v104 = vld [vmem:[%s2 + $0xc0] sm:$0xf]
    %v105 = vld [vmem:[%s2 + $0xc4] sm:$0xf]
    %v106 = vld [vmem:[%s2 + $0xc8] sm:$0xf]
    %v107 = vld [vmem:[%s2 + $0xcc] sm:$0xf]
    %v108 = vld [vmem:[%s2 + $0xd0] sm:$0xf]
    %v109 = vld [vmem:[%s2 + $0xd4] sm:$0xf]
    %v110 = vld [vmem:[%s2 + $0xd8] sm:$0xf]
    %v111 = vld [vmem:[%s2 + $0xdc] sm:$0xf]
    %v112 = vld [vmem:[%s2 + $0xe0] sm:$0xf]
    %v113 = vld [vmem:[%s2 + $0xe4] sm:$0xf]
    %v114 = vld [vmem:[%s2 + $0xe8] sm:$0xf]
    %v115 = vld [vmem:[%s2 + $0xec] sm:$0xf]
    %v116 = vld [vmem:[%s2 + $0xf0] sm:$0xf]
    %v117 = vld [vmem:[%s2 + $0xf4] sm:$0xf]
    %v118 = vld [vmem:[%s2 + $0xf8] sm:$0xf]
    %v119 = vld [vmem:[%s2 + $0xfc] sm:$0xf]
    %v120 = vld [vmem:[%s2 + $0x100] sm:$0xf]
    %v121 = vld [vmem:[%s2 + $0x104] sm:$0xf]
    %v122 = vld [vmem:[%s2 + $0x108] sm:$0xf]
    %v123 = vld [vmem:[%s2 + $0x10c] sm:$0xf]
    %v124 = vld [vmem:[%s2 + $0x110] sm:$0xf]
    %v125 = vld [vmem:[%s2 + $0x114] sm:$0xf]
    %v126 = vld [vmem:[%s2 + $0x118] sm:$0xf]
    %v127 = vld [vmem:[%s2 + $0x11c] sm:$0xf]
    %v128 = vld [vmem:[%s2 + $0x120] sm:$0xf]
    %v129 = vld [vmem:[%s2 + $0x124] sm:$0xf]
    %v130 = vld [vmem:[%s2 + $0x128] sm:$0xf]
    %v131 = vld [vmem:[%s2 + $0x12c] sm:$0xf]
    %v132 = vld [vmem:[%s2 + $0x130] sm:$0xf]
    %v133 = vld [vmem:[%s2 + $0x134] sm:$0xf]
    %v134 = vld [vmem:[%s2 + $0x138] sm:$0xf]
    %v135 = vld [vmem:[%s2 + $0x13c] sm:$0xf]
    %v136 = vld [vmem:[%s2 + $0x140] sm:$0xf]
    %v137 = vld [vmem:[%s2 + $0x144] sm:$0xf]
    %v138 = vld [vmem:[%s2 + $0x148] sm:$0xf]
    %v139 = vld [vmem:[%s2 + $0x14c] sm:$0xf]
    %v140 = vld [vmem:[%s2 + $0x150] sm:$0xf]
    %v141 = vld [vmem:[%s2 + $0x154] sm:$0xf]
    %v142 = vld [vmem:[%s2 + $0x158] sm:$0xf]
    %v143 = vld [vmem:[%s2 + $0x15c] sm:$0xf]
    %v144 = vld [vmem:[%s2 + $0x160] sm:$0xf]
    %v145 = vld [vmem:[%s2 + $0x164] sm:$0xf]
    %v146 = vld [vmem:[%s2 + $0x168] sm:$0xf]
    %v147 = vld [vmem:[%s2 + $0x16c] sm:$0xf]
    %v148 = vld [vmem:[%s2 + $0x170] sm:$0xf]
    %v149 = vld [vmem:[%s2 + $0x174] sm:$0xf]
    %v150 = vld [vmem:[%s2 + $0x178] sm:$0xf]
    %v151 = vld [vmem:[%s2 + $0x17c] sm:$0xf]
    %v152 = vld [vmem:[%s2 + $0x180] sm:$0xf]
    %v153 = vld [vmem:[%s2 + $0x184] sm:$0xf]
    %v154 = vld [vmem:[%s2 + $0x188] sm:$0xf]
    %v155 = vld [vmem:[%s2 + $0x18c] sm:$0xf]
    %v156 = vld [vmem:[%s2 + $0x190] sm:$0xf]
    %v157 = vld [vmem:[%s2 + $0x194] sm:$0xf]
    %v158 = vld [vmem:[%s2 + $0x198] sm:$0xf]
    %v159 = vld [vmem:[%s2 + $0x19c] sm:$0xf]
    %v160 = vld [vmem:[%s2 + $0x1a0] sm:$0xf]
    %v161 = vld [vmem:[%s2 + $0x1a4] sm:$0xf]
    %v162 = vld [vmem:[%s2 + $0x1a8] sm:$0xf]
    %v163 = vld [vmem:[%s2 + $0x1ac] sm:$0xf]
    %v164 = vld [vmem:[%s2 + $0x1b0] sm:$0xf]
    %v165 = vld [vmem:[%s2 + $0x1b4] sm:$0xf]
    %v166 = vld [vmem:[%s2 + $0x1b8] sm:$0xf]
    %v167 = vld [vmem:[%s2 + $0x1bc] sm:$0xf]
    %v168 = vld [vmem:[%s2 + $0x1c0] sm:$0xf]
    %v169 = vld [vmem:[%s2 + $0x1c4] sm:$0xf]
    %v170 = vld [vmem:[%s2 + $0x1c8] sm:$0xf]
    %v171 = vld [vmem:[%s2 + $0x1cc] sm:$0xf]
    %v172 = vld [vmem:[%s2 + $0x1d0] sm:$0xf]
    %v173 = vld [vmem:[%s2 + $0x1d4] sm:$0xf]
    %v174 = vld [vmem:[%s2 + $0x1d8] sm:$0xf]
    %v175 = vld [vmem:[%s2 + $0x1dc] sm:$0xf]
    %v176 = vld [vmem:[%s2 + $0x1e0] sm:$0xf]
    %v177 = vld [vmem:[%s2 + $0x1e4] sm:$0xf]
    %v178 = vld [vmem:[%s2 + $0x1e8] sm:$0xf]
    %v179 = vld [vmem:[%s2 + $0x1ec] sm:$0xf]
    %v180 = vld [vmem:[%s2 + $0x1f0] sm:$0xf]
    %v181 = vld [vmem:[%s2 + $0x1f4] sm:$0xf]
    %v182 = vld [vmem:[%s2 + $0x1f8] sm:$0xf]
    %v183 = vld [vmem:[%s2 + $0x1fc] sm:$0xf]
    %v184 = vld [vmem:[%s3] sm:$0x1]
    %v186 = vperm.slane %v184, 0
    %v192 = vunpack.c.l.b16 %v52
    %v193 = vunpack.c.h.b16 %v52
    %v194 = vunpack.c.l.b16 %v53
    %v195 = vunpack.c.h.b16 %v53
    %v196 = vunpack.c.l.b16 %v54
    %v197 = vunpack.c.h.b16 %v54
    %v198 = vunpack.c.l.b16 %v55
    %v199 = vunpack.c.h.b16 %v55
    %v200 = vpack.c.b16 %v192, %v192
    %v201 = vpack.c.b16 %v193, %v193
    %v202 = vpack.c.b16 %v194, %v194
    %v203 = vpack.c.b16 %v195, %v195
    %v204 = vpack.c.b16 %v196, %v196
    %v205 = vpack.c.b16 %v197, %v197
    %v206 = vpack.c.b16 %v198, %v198
    %v207 = vpack.c.b16 %v199, %v199
    %v344 = vunpack.c.l.b16 %v56
    %v345 = vunpack.c.l.b16 %v57
    %v346 = vunpack.c.l.b16 %v58
    %v347 = vunpack.c.l.b16 %v59
    %v348 = vunpack.c.l.b16 %v60
    %v349 = vunpack.c.l.b16 %v61
    %v350 = vunpack.c.l.b16 %v62
    %v351 = vunpack.c.l.b16 %v63
    %v352 = vunpack.c.l.b16 %v64
    %v353 = vunpack.c.l.b16 %v65
    %v354 = vunpack.c.l.b16 %v66
    %v355 = vunpack.c.l.b16 %v67
    %v356 = vunpack.c.l.b16 %v68
    %v357 = vunpack.c.l.b16 %v69
    %v358 = vunpack.c.l.b16 %v70
    %v359 = vunpack.c.l.b16 %v71
    %v360 = vunpack.c.l.b16 %v72
    %v361 = vunpack.c.l.b16 %v73
    %v362 = vunpack.c.l.b16 %v74
    %v363 = vunpack.c.l.b16 %v75
    %v364 = vunpack.c.l.b16 %v76
    %v365 = vunpack.c.l.b16 %v77
    %v366 = vunpack.c.l.b16 %v78
    %v367 = vunpack.c.l.b16 %v79
    %v368 = vunpack.c.l.b16 %v80
    %v369 = vunpack.c.l.b16 %v81
    %v370 = vunpack.c.l.b16 %v82
    %v371 = vunpack.c.l.b16 %v83
    %v372 = vunpack.c.l.b16 %v84
    %v373 = vunpack.c.l.b16 %v85
    %v374 = vunpack.c.l.b16 %v86
    %v375 = vunpack.c.l.b16 %v87
    %v376 = vunpack.c.l.b16 %v88
    %v377 = vunpack.c.l.b16 %v89
    %v378 = vunpack.c.l.b16 %v90
    %v379 = vunpack.c.l.b16 %v91
    %v380 = vunpack.c.l.b16 %v92
    %v381 = vunpack.c.l.b16 %v93
    %v382 = vunpack.c.l.b16 %v94
    %v383 = vunpack.c.l.b16 %v95
    %v384 = vunpack.c.l.b16 %v96
    %v385 = vunpack.c.l.b16 %v97
    %v386 = vunpack.c.l.b16 %v98
    %v387 = vunpack.c.l.b16 %v99
    %v388 = vunpack.c.l.b16 %v100
    %v389 = vunpack.c.l.b16 %v101
    %v390 = vunpack.c.l.b16 %v102
    %v391 = vunpack.c.l.b16 %v103
    %v392 = vunpack.c.l.b16 %v104
    %v393 = vunpack.c.l.b16 %v105
    %v394 = vunpack.c.l.b16 %v106
    %v395 = vunpack.c.l.b16 %v107
    %v396 = vunpack.c.l.b16 %v108
    %v397 = vunpack.c.l.b16 %v109
    %v398 = vunpack.c.l.b16 %v110
    %v399 = vunpack.c.l.b16 %v111
    %v400 = vunpack.c.l.b16 %v112
    %v401 = vunpack.c.l.b16 %v113
    %v402 = vunpack.c.l.b16 %v114
    %v403 = vunpack.c.l.b16 %v115
    %v404 = vunpack.c.l.b16 %v116
    %v405 = vunpack.c.l.b16 %v117
    %v406 = vunpack.c.l.b16 %v118
    %v407 = vunpack.c.l.b16 %v119
    %v408 = vunpack.c.l.b16 %v120
    %v409 = vunpack.c.l.b16 %v121
    %v410 = vunpack.c.l.b16 %v122
    %v411 = vunpack.c.l.b16 %v123
    %v412 = vunpack.c.l.b16 %v124
    %v413 = vunpack.c.l.b16 %v125
    %v414 = vunpack.c.l.b16 %v126
    %v415 = vunpack.c.l.b16 %v127
    %v416 = vunpack.c.l.b16 %v128
    %v417 = vunpack.c.l.b16 %v129
    %v418 = vunpack.c.l.b16 %v130
    %v419 = vunpack.c.l.b16 %v131
    %v420 = vunpack.c.l.b16 %v132
    %v421 = vunpack.c.l.b16 %v133
    %v422 = vunpack.c.l.b16 %v134
    %v423 = vunpack.c.l.b16 %v135
    %v424 = vunpack.c.l.b16 %v136
    %v425 = vunpack.c.l.b16 %v137
    %v426 = vunpack.c.l.b16 %v138
    %v427 = vunpack.c.l.b16 %v139
    %v428 = vunpack.c.l.b16 %v140
    %v429 = vunpack.c.l.b16 %v141
    %v430 = vunpack.c.l.b16 %v142
    %v431 = vunpack.c.l.b16 %v143
    %v432 = vunpack.c.l.b16 %v144
    %v433 = vunpack.c.l.b16 %v145
    %v434 = vunpack.c.l.b16 %v146
    %v435 = vunpack.c.l.b16 %v147
    %v436 = vunpack.c.l.b16 %v148
    %v437 = vunpack.c.l.b16 %v149
    %v438 = vunpack.c.l.b16 %v150
    %v439 = vunpack.c.l.b16 %v151
    %v440 = vunpack.c.l.b16 %v152
    %v441 = vunpack.c.l.b16 %v153
    %v442 = vunpack.c.l.b16 %v154
    %v443 = vunpack.c.l.b16 %v155
    %v444 = vunpack.c.l.b16 %v156
    %v445 = vunpack.c.l.b16 %v157
    %v446 = vunpack.c.l.b16 %v158
    %v447 = vunpack.c.l.b16 %v159
    %v448 = vunpack.c.l.b16 %v160
    %v449 = vunpack.c.l.b16 %v161
    %v450 = vunpack.c.l.b16 %v162
    %v451 = vunpack.c.l.b16 %v163
    %v452 = vunpack.c.l.b16 %v164
    %v453 = vunpack.c.l.b16 %v165
    %v454 = vunpack.c.l.b16 %v166
    %v455 = vunpack.c.l.b16 %v167
    %v456 = vunpack.c.l.b16 %v168
    %v457 = vunpack.c.l.b16 %v169
    %v458 = vunpack.c.l.b16 %v170
    %v459 = vunpack.c.l.b16 %v171
    %v460 = vunpack.c.l.b16 %v172
    %v461 = vunpack.c.l.b16 %v173
    %v462 = vunpack.c.l.b16 %v174
    %v463 = vunpack.c.l.b16 %v175
    %v464 = vunpack.c.l.b16 %v176
    %v465 = vunpack.c.l.b16 %v177
    %v466 = vunpack.c.l.b16 %v178
    %v467 = vunpack.c.l.b16 %v179
    %v468 = vunpack.c.l.b16 %v180
    %v469 = vunpack.c.l.b16 %v181
    %v470 = vunpack.c.l.b16 %v182
    %v471 = vunpack.c.l.b16 %v183
    %v472 = vpack.c.b16 %v345, %v344
    %v473 = vpack.c.b16 %v347, %v346
    %v474 = vpack.c.b16 %v349, %v348
    %v475 = vpack.c.b16 %v351, %v350
    %v476 = vpack.c.b16 %v353, %v352
    %v477 = vpack.c.b16 %v355, %v354
    %v478 = vpack.c.b16 %v357, %v356
    %v479 = vpack.c.b16 %v359, %v358
    %v480 = vpack.c.b16 %v361, %v360
    %v481 = vpack.c.b16 %v363, %v362
    %v482 = vpack.c.b16 %v365, %v364
    %v483 = vpack.c.b16 %v367, %v366
    %v484 = vpack.c.b16 %v369, %v368
    %v485 = vpack.c.b16 %v371, %v370
    %v486 = vpack.c.b16 %v373, %v372
    %v487 = vpack.c.b16 %v375, %v374
    %v488 = vpack.c.b16 %v377, %v376
    %v489 = vpack.c.b16 %v379, %v378
    %v490 = vpack.c.b16 %v381, %v380
    %v491 = vpack.c.b16 %v383, %v382
    %v492 = vpack.c.b16 %v385, %v384
    %v493 = vpack.c.b16 %v387, %v386
    %v494 = vpack.c.b16 %v389, %v388
    %v495 = vpack.c.b16 %v391, %v390
    %v496 = vpack.c.b16 %v393, %v392
    %v497 = vpack.c.b16 %v395, %v394
    %v498 = vpack.c.b16 %v397, %v396
    %v499 = vpack.c.b16 %v399, %v398
    %v500 = vpack.c.b16 %v401, %v400
    %v501 = vpack.c.b16 %v403, %v402
    %v502 = vpack.c.b16 %v405, %v404
    %v503 = vpack.c.b16 %v407, %v406
    %v504 = vpack.c.b16 %v409, %v408
    %v505 = vpack.c.b16 %v411, %v410
    %v506 = vpack.c.b16 %v413, %v412
    %v507 = vpack.c.b16 %v415, %v414
    %v508 = vpack.c.b16 %v417, %v416
    %v509 = vpack.c.b16 %v419, %v418
    %v510 = vpack.c.b16 %v421, %v420
    %v511 = vpack.c.b16 %v423, %v422
    %v512 = vpack.c.b16 %v425, %v424
    %v513 = vpack.c.b16 %v427, %v426
    %v514 = vpack.c.b16 %v429, %v428
    %v515 = vpack.c.b16 %v431, %v430
    %v516 = vpack.c.b16 %v433, %v432
    %v517 = vpack.c.b16 %v435, %v434
    %v518 = vpack.c.b16 %v437, %v436
    %v519 = vpack.c.b16 %v439, %v438
    %v520 = vpack.c.b16 %v441, %v440
    %v521 = vpack.c.b16 %v443, %v442
    %v522 = vpack.c.b16 %v445, %v444
    %v523 = vpack.c.b16 %v447, %v446
    %v524 = vpack.c.b16 %v449, %v448
    %v525 = vpack.c.b16 %v451, %v450
    %v526 = vpack.c.b16 %v453, %v452
    %v527 = vpack.c.b16 %v455, %v454
    %v528 = vpack.c.b16 %v457, %v456
    %v529 = vpack.c.b16 %v459, %v458
    %v530 = vpack.c.b16 %v461, %v460
    %v531 = vpack.c.b16 %v463, %v462
    %v532 = vpack.c.b16 %v465, %v464
    %v533 = vpack.c.b16 %v467, %v466
    %v534 = vpack.c.b16 %v469, %v468
    %v535 = vpack.c.b16 %v471, %v470
    %600 = vmatpush.bf16.msra.mxu0 %v479
    %601 = vmatpush.bf16.msra.mxu0 %v478
    %602 = vmatpush.bf16.msra.mxu0 %v477
    %603 = vmatpush.bf16.msra.mxu0 %v476
    %604 = vmatpush.bf16.msra.mxu0 %v475
    %605 = vmatpush.bf16.msra.mxu0 %v474
    %606 = vmatpush.bf16.msra.mxu0 %v473
    %607 = vmatpush.bf16.msra.mxu0 %v472
    %608 = vmatmul.bf16.gmra.mxu0 %v200
    %v609 = vpop.f32.mrf.mxu0
    %v610 = vadd.f32 %v186, %v609
    %v611 = vpop.f32.mrf.mxu0
    %612 = vdwg.mxu0
    %613 = vmatpush.bf16.msra.mxu0 %v487
    %614 = vmatpush.bf16.msra.mxu0 %v486
    %615 = vmatpush.bf16.msra.mxu0 %v485
    %616 = vmatpush.bf16.msra.mxu0 %v484
    %617 = vmatpush.bf16.msra.mxu0 %v483
    %618 = vmatpush.bf16.msra.mxu0 %v482
    %619 = vmatpush.bf16.msra.mxu0 %v481
    %620 = vmatpush.bf16.msra.mxu0 %v480
    %621 = vmatmul.bf16.gmra.mxu0 %v201
    %v622 = vpop.f32.mrf.mxu0
    %v623 = vadd.f32 %v610, %v622
    %v624 = vpop.f32.mrf.mxu0
    %625 = vdwg.mxu0
    %626 = vmatpush.bf16.msra.mxu0 %v495
    %627 = vmatpush.bf16.msra.mxu0 %v494
    %628 = vmatpush.bf16.msra.mxu0 %v493
    %629 = vmatpush.bf16.msra.mxu0 %v492
    %630 = vmatpush.bf16.msra.mxu0 %v491
    %631 = vmatpush.bf16.msra.mxu0 %v490
    %632 = vmatpush.bf16.msra.mxu0 %v489
    %633 = vmatpush.bf16.msra.mxu0 %v488
    %634 = vmatmul.bf16.gmra.mxu0 %v202
    %v635 = vpop.f32.mrf.mxu0
    %v636 = vadd.f32 %v623, %v635
    %v637 = vpop.f32.mrf.mxu0
    %638 = vdwg.mxu0
    %639 = vmatpush.bf16.msra.mxu0 %v503
    %640 = vmatpush.bf16.msra.mxu0 %v502
    %641 = vmatpush.bf16.msra.mxu0 %v501
    %642 = vmatpush.bf16.msra.mxu0 %v500
    %643 = vmatpush.bf16.msra.mxu0 %v499
    %644 = vmatpush.bf16.msra.mxu0 %v498
    %645 = vmatpush.bf16.msra.mxu0 %v497
    %646 = vmatpush.bf16.msra.mxu0 %v496
    %647 = vmatmul.bf16.gmra.mxu0 %v203
    %v648 = vpop.f32.mrf.mxu0
    %v649 = vadd.f32 %v636, %v648
    %v650 = vpop.f32.mrf.mxu0
    %651 = vdwg.mxu0
    %652 = vmatpush.bf16.msra.mxu0 %v511
    %653 = vmatpush.bf16.msra.mxu0 %v510
    %654 = vmatpush.bf16.msra.mxu0 %v509
    %655 = vmatpush.bf16.msra.mxu0 %v508
    %656 = vmatpush.bf16.msra.mxu0 %v507
    %657 = vmatpush.bf16.msra.mxu0 %v506
    %658 = vmatpush.bf16.msra.mxu0 %v505
    %659 = vmatpush.bf16.msra.mxu0 %v504
    %660 = vmatmul.bf16.gmra.mxu0 %v204
    %v661 = vpop.f32.mrf.mxu0
    %v662 = vadd.f32 %v649, %v661
    %v663 = vpop.f32.mrf.mxu0
    %664 = vdwg.mxu0
    %665 = vmatpush.bf16.msra.mxu0 %v519
    %666 = vmatpush.bf16.msra.mxu0 %v518
    %667 = vmatpush.bf16.msra.mxu0 %v517
    %668 = vmatpush.bf16.msra.mxu0 %v516
    %669 = vmatpush.bf16.msra.mxu0 %v515
    %670 = vmatpush.bf16.msra.mxu0 %v514
    %671 = vmatpush.bf16.msra.mxu0 %v513
    %672 = vmatpush.bf16.msra.mxu0 %v512
    %673 = vmatmul.bf16.gmra.mxu0 %v205
    %v674 = vpop.f32.mrf.mxu0
    %v675 = vadd.f32 %v662, %v674
    %v676 = vpop.f32.mrf.mxu0
    %677 = vdwg.mxu0
    %678 = vmatpush.bf16.msra.mxu0 %v527
    %679 = vmatpush.bf16.msra.mxu0 %v526
    %680 = vmatpush.bf16.msra.mxu0 %v525
    %681 = vmatpush.bf16.msra.mxu0 %v524
    %682 = vmatpush.bf16.msra.mxu0 %v523
    %683 = vmatpush.bf16.msra.mxu0 %v522
    %684 = vmatpush.bf16.msra.mxu0 %v521
    %685 = vmatpush.bf16.msra.mxu0 %v520
    %686 = vmatmul.bf16.gmra.mxu0 %v206
    %v687 = vpop.f32.mrf.mxu0
    %v688 = vadd.f32 %v675, %v687
    %v689 = vpop.f32.mrf.mxu0
    %690 = vdwg.mxu0
    %691 = vmatpush.bf16.msra.mxu0 %v535
    %692 = vmatpush.bf16.msra.mxu0 %v534
    %693 = vmatpush.bf16.msra.mxu0 %v533
    %694 = vmatpush.bf16.msra.mxu0 %v532
    %695 = vmatpush.bf16.msra.mxu0 %v531
    %696 = vmatpush.bf16.msra.mxu0 %v530
    %697 = vmatpush.bf16.msra.mxu0 %v529
    %698 = vmatpush.bf16.msra.mxu0 %v528
    %699 = vmatmul.bf16.gmra.mxu0 %v207
    %v700 = vpop.f32.mrf.mxu0
    %v701 = vadd.f32 %v688, %v700
    %v702 = vpop.f32.mrf.mxu0
    %703 = vdwg.mxu0
    %v704 = vmax.f32 %v701, 0.0
    %v705 = vpack.c.bf16 %v704, %v704
    %v706 = vld [vmem:[%s4] sm:$0xf]
    %v707 = vld [vmem:[%s4 + $0x4] sm:$0xf]
    %v708 = vld [vmem:[%s4 + $0x8] sm:$0xf]
    %v709 = vld [vmem:[%s4 + $0xc] sm:$0xf]
    %v710 = vld [vmem:[%s4 + $0x10] sm:$0xf]
    %v711 = vld [vmem:[%s4 + $0x14] sm:$0xf]
    %v712 = vld [vmem:[%s4 + $0x18] sm:$0xf]
    %v713 = vld [vmem:[%s4 + $0x1c] sm:$0xf]
    %v714 = vld [vmem:[%s5] sm:$0x1]
    %v716 = vperm.slane %v714, 0
    %v726 = vunpack.c.l.b16 %v706
    %v727 = vunpack.c.l.b16 %v707
    %v728 = vunpack.c.l.b16 %v708
    %v729 = vunpack.c.l.b16 %v709
    %v730 = vunpack.c.l.b16 %v710
    %v731 = vunpack.c.l.b16 %v711
    %v732 = vunpack.c.l.b16 %v712
    %v733 = vunpack.c.l.b16 %v713
    %v734 = vpack.c.b16 %v727, %v726
    %v735 = vpack.c.b16 %v729, %v728
    %v736 = vpack.c.b16 %v731, %v730
    %v737 = vpack.c.b16 %v733, %v732
    %vm742 = vcmask 523264
    %v744 = vsel %vm742, %v705, 0
    %746 = vmatpush.bf16.msra.mxu0 0
    %747 = vmatpush.bf16.msra.mxu0 0
    %748 = vmatpush.bf16.msra.mxu0 0
    %749 = vmatpush.bf16.msra.mxu0 0
    %750 = vmatpush.bf16.msra.mxu0 %v737
    %751 = vmatpush.bf16.msra.mxu0 %v736
    %752 = vmatpush.bf16.msra.mxu0 %v735
    %753 = vmatpush.bf16.msra.mxu0 %v734
    %754 = vmatmul.bf16.gmra.mxu0 %v744
    %v755 = vpop.f32.mrf.mxu0
    %v756 = vadd.f32 %v716, %v755
    %v757 = vpop.f32.mrf.mxu0
    %758 = vdwg.mxu0
    %v759 = vmax.f32 %v756, 0.0
    %v760 = vpack.c.bf16 %v759, %v759
    %v761 = vld [vmem:[%s6] sm:$0xf]
    %v762 = vld [vmem:[%s6 + $0x4] sm:$0xf]
    %v763 = vld [vmem:[%s6 + $0x8] sm:$0xf]
    %v764 = vld [vmem:[%s6 + $0xc] sm:$0xf]
    %v765 = vld [vmem:[%s6 + $0x10] sm:$0xf]
    %v766 = vld [vmem:[%s6 + $0x14] sm:$0xf]
    %v767 = vld [vmem:[%s6 + $0x18] sm:$0xf]
    %v768 = vld [vmem:[%s6 + $0x1c] sm:$0xf]
    %v769 = vld [vmem:[%s6 + $0x20] sm:$0xf]
    %v770 = vld [vmem:[%s6 + $0x24] sm:$0xf]
    %v771 = vld [vmem:[%s6 + $0x28] sm:$0xf]
    %v772 = vld [vmem:[%s6 + $0x2c] sm:$0xf]
    %v773 = vld [vmem:[%s6 + $0x30] sm:$0xf]
    %v774 = vld [vmem:[%s6 + $0x34] sm:$0xf]
    %v775 = vld [vmem:[%s6 + $0x38] sm:$0xf]
    %v776 = vld [vmem:[%s6 + $0x3c] sm:$0xf]
    %v777 = vld [vmem:[%s7] sm:$0x1]
    %v779 = vperm.slane %v777, 0
    %v797 = vunpack.c.l.b16 %v761
    %v798 = vunpack.c.l.b16 %v762
    %v799 = vunpack.c.l.b16 %v763
    %v800 = vunpack.c.l.b16 %v764
    %v801 = vunpack.c.l.b16 %v765
    %v802 = vunpack.c.l.b16 %v766
    %v803 = vunpack.c.l.b16 %v767
    %v804 = vunpack.c.l.b16 %v768
    %v805 = vunpack.c.l.b16 %v769
    %v806 = vunpack.c.l.b16 %v770
    %v807 = vunpack.c.l.b16 %v771
    %v808 = vunpack.c.l.b16 %v772
    %v809 = vunpack.c.l.b16 %v773
    %v810 = vunpack.c.l.b16 %v774
    %v811 = vunpack.c.l.b16 %v775
    %v812 = vunpack.c.l.b16 %v776
    %v813 = vpack.c.b16 %v798, %v797
    %v814 = vpack.c.b16 %v800, %v799
    %v815 = vpack.c.b16 %v802, %v801
    %v816 = vpack.c.b16 %v804, %v803
    %v817 = vpack.c.b16 %v806, %v805
    %v818 = vpack.c.b16 %v808, %v807
    %v819 = vpack.c.b16 %v810, %v809
    %v820 = vpack.c.b16 %v812, %v811
    %829 = vmatpush.bf16.msra.mxu0 %v820
    %830 = vmatpush.bf16.msra.mxu0 %v819
    %831 = vmatpush.bf16.msra.mxu0 %v818
    %832 = vmatpush.bf16.msra.mxu0 %v817
    %833 = vmatpush.bf16.msra.mxu0 %v816
    %834 = vmatpush.bf16.msra.mxu0 %v815
    %835 = vmatpush.bf16.msra.mxu0 %v814
    %836 = vmatpush.bf16.msra.mxu0 %v813
    %837 = vmatmul.bf16.gmra.mxu0 %v760
    %v838 = vpop.f32.mrf.mxu0
    %v839 = vadd.f32 %v779, %v838
    %v840 = vpop.f32.mrf.mxu0
    %841 = vdwg.mxu0
    %v842 = vmax.f32 %v839, 0.0
    %v843 = vpack.c.bf16 %v842, %v842
    %v844 = vld [vmem:[%s8] sm:$0xff]
    %v845 = vld [vmem:[%s8 + $0x8] sm:$0xff]
    %v846 = vld [vmem:[%s8 + $0x10] sm:$0xff]
    %v847 = vld [vmem:[%s8 + $0x18] sm:$0xff]
    %v848 = vld [vmem:[%s9] sm:$0x3]
    %v850 = vperm.slane %v848, 0
    %v851 = vperm.slane %v848, 1
    %v858 = vunpack.c.l.b16 %v844
    %v859 = vunpack.c.h.b16 %v844
    %v860 = vunpack.c.l.b16 %v845
    %v861 = vunpack.c.h.b16 %v845
    %v862 = vunpack.c.l.b16 %v846
    %v863 = vunpack.c.h.b16 %v846
    %v864 = vunpack.c.l.b16 %v847
    %v865 = vunpack.c.h.b16 %v847
    %v866 = vpack.c.b16 %v860, %v858
    %v867 = vpack.c.b16 %v861, %v859
    %v868 = vpack.c.b16 %v864, %v862
    %v869 = vpack.c.b16 %v865, %v863
    %vm874 = vcmask 261120
    %v876 = vsel %vm874, %v843, 0
    %878 = vmatpush.bf16.msra.mxu0 0
    %879 = vmatpush.bf16.msra.mxu0 0
    %880 = vmatpush.bf16.msra.mxu0 0
    %881 = vmatpush.bf16.msra.mxu0 0
    %882 = vmatpush.bf16.msra.mxu0 0
    %883 = vmatpush.bf16.msra.mxu0 0
    %884 = vmatpush.bf16.msra.mxu0 %v868
    %885 = vmatpush.bf16.msra.mxu0 %v866
    %886 = vmatmul.bf16.gmra.mxu0 %v876
    %v887 = vpop.f32.mrf.mxu0
    %v888 = vadd.f32 %v850, %v887
    %v889 = vpop.f32.mrf.mxu0
    %890 = vdwg.mxu0
    %891 = vmatpush.bf16.msra.mxu0 0
    %892 = vmatpush.bf16.msra.mxu0 0
    %893 = vmatpush.bf16.msra.mxu0 0
    %894 = vmatpush.bf16.msra.mxu0 0
    %895 = vmatpush.bf16.msra.mxu0 0
    %896 = vmatpush.bf16.msra.mxu0 0
    %897 = vmatpush.bf16.msra.mxu0 %v869
    %898 = vmatpush.bf16.msra.mxu0 %v867
    %899 = vmatmul.bf16.gmra.mxu0 %v876
    %v900 = vpop.f32.mrf.mxu0
    %v901 = vadd.f32 %v851, %v900
    %v902 = vpop.f32.mrf.mxu0
    %903 = vdwg.mxu0
    %v904 = vld [vmem:[%s1] sm:$0xff]
    %v905 = vmul.f32 %v901, 0.5
    %v906 = vmul.f32 %v905, 1.442695
    %v907 = vpow.pop %v906
    %v908 = vmul.f32 %v904, %v907
    %v909 = vadd.f32 %v888, %v908
    %v910 = vpack.c.bf16 %v909, %v909
    %v911 = vld [vmem:[%s10] sm:$0xf]
    %v912 = vld [vmem:[%s10 + $0x4] sm:$0xf]
    %v913 = vld [vmem:[%s10 + $0x8] sm:$0xf]
    %v914 = vld [vmem:[%s10 + $0xc] sm:$0xf]
    %v915 = vld [vmem:[%s10 + $0x10] sm:$0xf]
    %v916 = vld [vmem:[%s10 + $0x14] sm:$0xf]
    %v917 = vld [vmem:[%s10 + $0x18] sm:$0xf]
    %v918 = vld [vmem:[%s10 + $0x1c] sm:$0xf]
    %v919 = vld [vmem:[%s10 + $0x20] sm:$0xf]
    %v920 = vld [vmem:[%s10 + $0x24] sm:$0xf]
    %v921 = vld [vmem:[%s10 + $0x28] sm:$0xf]
    %v922 = vld [vmem:[%s10 + $0x2c] sm:$0xf]
    %v923 = vld [vmem:[%s10 + $0x30] sm:$0xf]
    %v924 = vld [vmem:[%s10 + $0x34] sm:$0xf]
    %v925 = vld [vmem:[%s10 + $0x38] sm:$0xf]
    %v926 = vld [vmem:[%s10 + $0x3c] sm:$0xf]
    %v927 = vld [vmem:[%s11] sm:$0x1]
    %v929 = vperm.slane %v927, 0
    %v947 = vunpack.c.l.b16 %v911
    %v948 = vunpack.c.l.b16 %v912
    %v949 = vunpack.c.l.b16 %v913
    %v950 = vunpack.c.l.b16 %v914
    %v951 = vunpack.c.l.b16 %v915
    %v952 = vunpack.c.l.b16 %v916
    %v953 = vunpack.c.l.b16 %v917
    %v954 = vunpack.c.l.b16 %v918
    %v955 = vunpack.c.l.b16 %v919
    %v956 = vunpack.c.l.b16 %v920
    %v957 = vunpack.c.l.b16 %v921
    %v958 = vunpack.c.l.b16 %v922
    %v959 = vunpack.c.l.b16 %v923
    %v960 = vunpack.c.l.b16 %v924
    %v961 = vunpack.c.l.b16 %v925
    %v962 = vunpack.c.l.b16 %v926
    %v963 = vpack.c.b16 %v948, %v947
    %v964 = vpack.c.b16 %v950, %v949
    %v965 = vpack.c.b16 %v952, %v951
    %v966 = vpack.c.b16 %v954, %v953
    %v967 = vpack.c.b16 %v956, %v955
    %v968 = vpack.c.b16 %v958, %v957
    %v969 = vpack.c.b16 %v960, %v959
    %v970 = vpack.c.b16 %v962, %v961
    %979 = vmatpush.bf16.msra.mxu0 %v970
    %980 = vmatpush.bf16.msra.mxu0 %v969
    %981 = vmatpush.bf16.msra.mxu0 %v968
    %982 = vmatpush.bf16.msra.mxu0 %v967
    %983 = vmatpush.bf16.msra.mxu0 %v966
    %984 = vmatpush.bf16.msra.mxu0 %v965
    %985 = vmatpush.bf16.msra.mxu0 %v964
    %986 = vmatpush.bf16.msra.mxu0 %v963
    %987 = vmatmul.bf16.gmra.mxu0 %v910
    %v988 = vpop.f32.mrf.mxu0
    %v989 = vadd.f32 %v929, %v988
    %v990 = vpop.f32.mrf.mxu0
    %991 = vdwg.mxu0
    %v992 = vmax.f32 %v989, 0.0
    %v993 = vpack.c.bf16 %v992, %v992
    %v994 = vld [vmem:[%s12] sm:$0xff]
    %v995 = vld [vmem:[%s12 + $0x8] sm:$0xff]
    %v996 = vld [vmem:[%s12 + $0x10] sm:$0xff]
    %v997 = vld [vmem:[%s12 + $0x18] sm:$0xff]
    %v998 = vld [vmem:[%s12 + $0x20] sm:$0xff]
    %v999 = vld [vmem:[%s12 + $0x28] sm:$0xff]
    %v1000 = vld [vmem:[%s12 + $0x30] sm:$0xff]
    %v1001 = vld [vmem:[%s12 + $0x38] sm:$0xff]
    %v1002 = vld [vmem:[%s12 + $0x40] sm:$0xff]
    %v1003 = vld [vmem:[%s12 + $0x48] sm:$0xff]
    %v1004 = vld [vmem:[%s12 + $0x50] sm:$0xff]
    %v1005 = vld [vmem:[%s12 + $0x58] sm:$0xff]
    %v1006 = vld [vmem:[%s12 + $0x60] sm:$0xff]
    %v1007 = vld [vmem:[%s12 + $0x68] sm:$0xff]
    %v1008 = vld [vmem:[%s12 + $0x70] sm:$0xff]
    %v1009 = vld [vmem:[%s12 + $0x78] sm:$0xff]
    %v1010 = vld [vmem:[%s12 + $0x80] sm:$0xff]
    %v1011 = vld [vmem:[%s12 + $0x88] sm:$0xff]
    %v1012 = vld [vmem:[%s12 + $0x90] sm:$0xff]
    %v1013 = vld [vmem:[%s12 + $0x98] sm:$0xff]
    %v1014 = vld [vmem:[%s12 + $0xa0] sm:$0xff]
    %v1015 = vld [vmem:[%s12 + $0xa8] sm:$0xff]
    %v1016 = vld [vmem:[%s12 + $0xb0] sm:$0xff]
    %v1017 = vld [vmem:[%s12 + $0xb8] sm:$0xff]
    %v1018 = vld [vmem:[%s12 + $0xc0] sm:$0xff]
    %v1019 = vld [vmem:[%s12 + $0xc8] sm:$0xff]
    %v1020 = vld [vmem:[%s12 + $0xd0] sm:$0xff]
    %v1021 = vld [vmem:[%s12 + $0xd8] sm:$0xff]
    %v1022 = vld [vmem:[%s12 + $0xe0] sm:$0xff]
    %v1023 = vld [vmem:[%s12 + $0xe8] sm:$0xff]
    %v1024 = vld [vmem:[%s12 + $0xf0] sm:$0xff]
    %v1025 = vld [vmem:[%s12 + $0xf8] sm:$0xff]
    %v1026 = vld [vmem:[%s13] sm:$0xff]
    %v1028 = vperm.slane %v1026, 0
    %v1029 = vperm.slane %v1026, 1
    %v1030 = vperm.slane %v1026, 2
    %v1031 = vperm.slane %v1026, 3
    %v1032 = vperm.slane %v1026, 4
    %v1033 = vperm.slane %v1026, 5
    %v1034 = vperm.slane %v1026, 6
    %v1035 = vperm.slane %v1026, 7
    %v1076 = vunpack.c.l.b16 %v994
    %v1077 = vunpack.c.h.b16 %v994
    %v1078 = vunpack.c.l.b16 %v995
    %v1079 = vunpack.c.h.b16 %v995
    %v1080 = vunpack.c.l.b16 %v996
    %v1081 = vunpack.c.h.b16 %v996
    %v1082 = vunpack.c.l.b16 %v997
    %v1083 = vunpack.c.h.b16 %v997
    %v1084 = vunpack.c.l.b16 %v998
    %v1085 = vunpack.c.h.b16 %v998
    %v1086 = vunpack.c.l.b16 %v999
    %v1087 = vunpack.c.h.b16 %v999
    %v1088 = vunpack.c.l.b16 %v1000
    %v1089 = vunpack.c.h.b16 %v1000
    %v1090 = vunpack.c.l.b16 %v1001
    %v1091 = vunpack.c.h.b16 %v1001
    %v1092 = vunpack.c.l.b16 %v1002
    %v1093 = vunpack.c.h.b16 %v1002
    %v1094 = vunpack.c.l.b16 %v1003
    %v1095 = vunpack.c.h.b16 %v1003
    %v1096 = vunpack.c.l.b16 %v1004
    %v1097 = vunpack.c.h.b16 %v1004
    %v1098 = vunpack.c.l.b16 %v1005
    %v1099 = vunpack.c.h.b16 %v1005
    %v1100 = vunpack.c.l.b16 %v1006
    %v1101 = vunpack.c.h.b16 %v1006
    %v1102 = vunpack.c.l.b16 %v1007
    %v1103 = vunpack.c.h.b16 %v1007
    %v1104 = vunpack.c.l.b16 %v1008
    %v1105 = vunpack.c.h.b16 %v1008
    %v1106 = vunpack.c.l.b16 %v1009
    %v1107 = vunpack.c.h.b16 %v1009
    %v1108 = vunpack.c.l.b16 %v1010
    %v1109 = vunpack.c.h.b16 %v1010
    %v1110 = vunpack.c.l.b16 %v1011
    %v1111 = vunpack.c.h.b16 %v1011
    %v1112 = vunpack.c.l.b16 %v1012
    %v1113 = vunpack.c.h.b16 %v1012
    %v1114 = vunpack.c.l.b16 %v1013
    %v1115 = vunpack.c.h.b16 %v1013
    %v1116 = vunpack.c.l.b16 %v1014
    %v1117 = vunpack.c.h.b16 %v1014
    %v1118 = vunpack.c.l.b16 %v1015
    %v1119 = vunpack.c.h.b16 %v1015
    %v1120 = vunpack.c.l.b16 %v1016
    %v1121 = vunpack.c.h.b16 %v1016
    %v1122 = vunpack.c.l.b16 %v1017
    %v1123 = vunpack.c.h.b16 %v1017
    %v1124 = vunpack.c.l.b16 %v1018
    %v1125 = vunpack.c.h.b16 %v1018
    %v1126 = vunpack.c.l.b16 %v1019
    %v1127 = vunpack.c.h.b16 %v1019
    %v1128 = vunpack.c.l.b16 %v1020
    %v1129 = vunpack.c.h.b16 %v1020
    %v1130 = vunpack.c.l.b16 %v1021
    %v1131 = vunpack.c.h.b16 %v1021
    %v1132 = vunpack.c.l.b16 %v1022
    %v1133 = vunpack.c.h.b16 %v1022
    %v1134 = vunpack.c.l.b16 %v1023
    %v1135 = vunpack.c.h.b16 %v1023
    %v1136 = vunpack.c.l.b16 %v1024
    %v1137 = vunpack.c.h.b16 %v1024
    %v1138 = vunpack.c.l.b16 %v1025
    %v1139 = vunpack.c.h.b16 %v1025
    %v1140 = vpack.c.b16 %v1084, %v1076
    %v1141 = vpack.c.b16 %v1085, %v1077
    %v1142 = vpack.c.b16 %v1086, %v1078
    %v1143 = vpack.c.b16 %v1087, %v1079
    %v1144 = vpack.c.b16 %v1088, %v1080
    %v1145 = vpack.c.b16 %v1089, %v1081
    %v1146 = vpack.c.b16 %v1090, %v1082
    %v1147 = vpack.c.b16 %v1091, %v1083
    %v1148 = vpack.c.b16 %v1100, %v1092
    %v1149 = vpack.c.b16 %v1101, %v1093
    %v1150 = vpack.c.b16 %v1102, %v1094
    %v1151 = vpack.c.b16 %v1103, %v1095
    %v1152 = vpack.c.b16 %v1104, %v1096
    %v1153 = vpack.c.b16 %v1105, %v1097
    %v1154 = vpack.c.b16 %v1106, %v1098
    %v1155 = vpack.c.b16 %v1107, %v1099
    %v1156 = vpack.c.b16 %v1116, %v1108
    %v1157 = vpack.c.b16 %v1117, %v1109
    %v1158 = vpack.c.b16 %v1118, %v1110
    %v1159 = vpack.c.b16 %v1119, %v1111
    %v1160 = vpack.c.b16 %v1120, %v1112
    %v1161 = vpack.c.b16 %v1121, %v1113
    %v1162 = vpack.c.b16 %v1122, %v1114
    %v1163 = vpack.c.b16 %v1123, %v1115
    %v1164 = vpack.c.b16 %v1132, %v1124
    %v1165 = vpack.c.b16 %v1133, %v1125
    %v1166 = vpack.c.b16 %v1134, %v1126
    %v1167 = vpack.c.b16 %v1135, %v1127
    %v1168 = vpack.c.b16 %v1136, %v1128
    %v1169 = vpack.c.b16 %v1137, %v1129
    %v1170 = vpack.c.b16 %v1138, %v1130
    %v1171 = vpack.c.b16 %v1139, %v1131
    %v1205 = vsel %vm742, %v993, 0
    %1207 = vmatpush.bf16.msra.mxu0 0
    %1208 = vmatpush.bf16.msra.mxu0 0
    %1209 = vmatpush.bf16.msra.mxu0 0
    %1210 = vmatpush.bf16.msra.mxu0 0
    %1211 = vmatpush.bf16.msra.mxu0 %v1164
    %1212 = vmatpush.bf16.msra.mxu0 %v1156
    %1213 = vmatpush.bf16.msra.mxu0 %v1148
    %1214 = vmatpush.bf16.msra.mxu0 %v1140
    %1215 = vmatmul.bf16.gmra.mxu0 %v1205
    %v1216 = vpop.f32.mrf.mxu0
    %v1217 = vadd.f32 %v1028, %v1216
    %v1218 = vpop.f32.mrf.mxu0
    %1219 = vdwg.mxu0
    %1220 = vmatpush.bf16.msra.mxu0 0
    %1221 = vmatpush.bf16.msra.mxu0 0
    %1222 = vmatpush.bf16.msra.mxu0 0
    %1223 = vmatpush.bf16.msra.mxu0 0
    %1224 = vmatpush.bf16.msra.mxu0 %v1165
    %1225 = vmatpush.bf16.msra.mxu0 %v1157
    %1226 = vmatpush.bf16.msra.mxu0 %v1149
    %1227 = vmatpush.bf16.msra.mxu0 %v1141
    %1228 = vmatmul.bf16.gmra.mxu0 %v1205
    %v1229 = vpop.f32.mrf.mxu0
    %v1230 = vadd.f32 %v1029, %v1229
    %v1231 = vpop.f32.mrf.mxu0
    %1232 = vdwg.mxu0
    %1233 = vmatpush.bf16.msra.mxu0 0
    %1234 = vmatpush.bf16.msra.mxu0 0
    %1235 = vmatpush.bf16.msra.mxu0 0
    %1236 = vmatpush.bf16.msra.mxu0 0
    %1237 = vmatpush.bf16.msra.mxu0 %v1166
    %1238 = vmatpush.bf16.msra.mxu0 %v1158
    %1239 = vmatpush.bf16.msra.mxu0 %v1150
    %1240 = vmatpush.bf16.msra.mxu0 %v1142
    %1241 = vmatmul.bf16.gmra.mxu0 %v1205
    %v1242 = vpop.f32.mrf.mxu0
    %v1243 = vadd.f32 %v1030, %v1242
    %v1244 = vpop.f32.mrf.mxu0
    %1245 = vdwg.mxu0
    %1246 = vmatpush.bf16.msra.mxu0 0
    %1247 = vmatpush.bf16.msra.mxu0 0
    %1248 = vmatpush.bf16.msra.mxu0 0
    %1249 = vmatpush.bf16.msra.mxu0 0
    %1250 = vmatpush.bf16.msra.mxu0 %v1167
    %1251 = vmatpush.bf16.msra.mxu0 %v1159
    %1252 = vmatpush.bf16.msra.mxu0 %v1151
    %1253 = vmatpush.bf16.msra.mxu0 %v1143
    %1254 = vmatmul.bf16.gmra.mxu0 %v1205
    %v1255 = vpop.f32.mrf.mxu0
    %v1256 = vadd.f32 %v1031, %v1255
    %v1257 = vpop.f32.mrf.mxu0
    %1258 = vdwg.mxu0
    %1259 = vmatpush.bf16.msra.mxu0 0
    %1260 = vmatpush.bf16.msra.mxu0 0
    %1261 = vmatpush.bf16.msra.mxu0 0
    %1262 = vmatpush.bf16.msra.mxu0 0
    %1263 = vmatpush.bf16.msra.mxu0 %v1168
    %1264 = vmatpush.bf16.msra.mxu0 %v1160
    %1265 = vmatpush.bf16.msra.mxu0 %v1152
    %1266 = vmatpush.bf16.msra.mxu0 %v1144
    %1267 = vmatmul.bf16.gmra.mxu0 %v1205
    %v1268 = vpop.f32.mrf.mxu0
    %v1269 = vadd.f32 %v1032, %v1268
    %v1270 = vpop.f32.mrf.mxu0
    %1271 = vdwg.mxu0
    %1272 = vmatpush.bf16.msra.mxu0 0
    %1273 = vmatpush.bf16.msra.mxu0 0
    %1274 = vmatpush.bf16.msra.mxu0 0
    %1275 = vmatpush.bf16.msra.mxu0 0
    %1276 = vmatpush.bf16.msra.mxu0 %v1169
    %1277 = vmatpush.bf16.msra.mxu0 %v1161
    %1278 = vmatpush.bf16.msra.mxu0 %v1153
    %1279 = vmatpush.bf16.msra.mxu0 %v1145
    %1280 = vmatmul.bf16.gmra.mxu0 %v1205
    %v1281 = vpop.f32.mrf.mxu0
    %v1282 = vadd.f32 %v1033, %v1281
    %v1283 = vpop.f32.mrf.mxu0
    %1284 = vdwg.mxu0
    %1285 = vmatpush.bf16.msra.mxu0 0
    %1286 = vmatpush.bf16.msra.mxu0 0
    %1287 = vmatpush.bf16.msra.mxu0 0
    %1288 = vmatpush.bf16.msra.mxu0 0
    %1289 = vmatpush.bf16.msra.mxu0 %v1170
    %1290 = vmatpush.bf16.msra.mxu0 %v1162
    %1291 = vmatpush.bf16.msra.mxu0 %v1154
    %1292 = vmatpush.bf16.msra.mxu0 %v1146
    %1293 = vmatmul.bf16.gmra.mxu0 %v1205
    %v1294 = vpop.f32.mrf.mxu0
    %v1295 = vadd.f32 %v1034, %v1294
    %v1296 = vpop.f32.mrf.mxu0
    %1297 = vdwg.mxu0
    %1298 = vmatpush.bf16.msra.mxu0 0
    %1299 = vmatpush.bf16.msra.mxu0 0
    %1300 = vmatpush.bf16.msra.mxu0 0
    %1301 = vmatpush.bf16.msra.mxu0 0
    %1302 = vmatpush.bf16.msra.mxu0 %v1171
    %1303 = vmatpush.bf16.msra.mxu0 %v1163
    %1304 = vmatpush.bf16.msra.mxu0 %v1155
    %1305 = vmatpush.bf16.msra.mxu0 %v1147
    %1306 = vmatmul.bf16.gmra.mxu0 %v1205
    %v1307 = vpop.f32.mrf.mxu0
    %v1308 = vadd.f32 %v1035, %v1307
    %v1309 = vpop.f32.mrf.mxu0
    %1310 = vdwg.mxu0
    %v1311 = vsub.f32 0.0, %v1217
    %v1312 = vsub.f32 0.0, %v1230
    %v1313 = vsub.f32 0.0, %v1243
    %v1314 = vsub.f32 0.0, %v1256
    %v1315 = vsub.f32 0.0, %v1269
    %v1316 = vsub.f32 0.0, %v1282
    %v1317 = vsub.f32 0.0, %v1295
    %v1318 = vsub.f32 0.0, %v1308
    %v1319 = vmul.f32 %v1311, 1.442695
    %v1320 = vpow.pop %v1319
    %v1321 = vmul.f32 %v1312, 1.442695
    %v1322 = vpow.pop %v1321
    %v1323 = vmul.f32 %v1313, 1.442695
    %v1324 = vpow.pop %v1323
    %v1325 = vmul.f32 %v1314, 1.442695
    %v1326 = vpow.pop %v1325
    %v1327 = vmul.f32 %v1315, 1.442695
    %v1328 = vpow.pop %v1327
    %v1329 = vmul.f32 %v1316, 1.442695
    %v1330 = vpow.pop %v1329
    %v1331 = vmul.f32 %v1317, 1.442695
    %v1332 = vpow.pop %v1331
    %v1333 = vmul.f32 %v1318, 1.442695
    %v1334 = vpow.pop %v1333
    %v1335 = vadd.f32 %v1320, 1.0
    %v1336 = vadd.f32 %v1322, 1.0
    %v1337 = vadd.f32 %v1324, 1.0
    %v1338 = vadd.f32 %v1326, 1.0
    %v1339 = vadd.f32 %v1328, 1.0
    %v1340 = vadd.f32 %v1330, 1.0
    %v1341 = vadd.f32 %v1332, 1.0
    %v1342 = vadd.f32 %v1334, 1.0
    %v1343 = vrcp.pop %v1335
    %v1344 = vrcp.pop %v1336
    %v1345 = vrcp.pop %v1337
    %v1346 = vrcp.pop %v1338
    %v1347 = vrcp.pop %v1339
    %v1348 = vrcp.pop %v1340
    %v1349 = vrcp.pop %v1341
    %v1350 = vrcp.pop %v1342
    %v1351 = vpack.c.bf16 %v1344, %v1343
    %v1352 = vpack.c.bf16 %v1346, %v1345
    %v1353 = vpack.c.bf16 %v1348, %v1347
    %v1354 = vpack.c.bf16 %v1350, %v1349
    %1355 = vst [vmem:[#allocation2] sm:$0xff] %v1351
    %1356 = vst [vmem:[#allocation2 + $0x8] sm:$0xff] %v1352
    %1357 = vst [vmem:[#allocation2 + $0x10] sm:$0xff] %v1353
    %1358 = vst [vmem:[#allocation2 + $0x18] sm:$0xff] %v1354
    %1359 = vst [vmem:[#allocation4] sm:$0xff] %v888
    %1360 = vst [vmem:[#allocation4 + $0x8] sm:$0xff] %v901
    // Predicated region
    $region58: #{tpu_custom_call.1} parent=1 // pred_check
      _
    $region59: #{tpu_custom_call.1} parent=1 // pred_check_branch
      %1362 = sbr.rel (0) target = $region61
    $region60: #{tpu_custom_call.1} parent=1 // pred_region
      %1364 = vsyncadd [#allocation3], 0
      %s1366 = sshll.u32 [#allocation2], 4
      %s1367 = int_to_ptr.vmem [resolvable:$true] %s1366
      %s1368 = sshll.u32 %s14, 4
      %s1369 = int_to_ptr.hbm [resolvable:$true] %s1368
      %1371 = dma.vmem_to_hbm [thread:$0]  %s1367, 512, %s1369, [#allocation3]
    $region61: #{tpu_custom_call.1} parent=1 // pred_fallthru
      _
    // Predicated region
    $region62: #{tpu_custom_call.1} parent=1 // pred_check
      _
    $region63: #{tpu_custom_call.1} parent=1 // pred_check_branch
      %1373 = sbr.rel (0) target = $region65
    $region64: #{tpu_custom_call.1} parent=1 // pred_region
      %1375 = vsyncadd [#allocation5], 0
      %s1377 = sshll.u32 [#allocation4], 4
      %s1378 = int_to_ptr.vmem [resolvable:$true] %s1377
      %s1379 = sshll.u32 %s15, 4
      %s1380 = int_to_ptr.hbm [resolvable:$true] %s1379
      %1382 = dma.vmem_to_hbm [thread:$0]  %s1378, 256, %s1380, [#allocation5]
    $region65: #{tpu_custom_call.1} parent=1 // pred_fallthru
      _
    // Predicated region
    $region66: #{tpu_custom_call.1} parent=1 // pred_check
      _
    $region67: #{tpu_custom_call.1} parent=1 // pred_check_branch
      %1384 = sbr.rel (0) target = $region69
    $region68: #{tpu_custom_call.1} parent=1 // pred_region
      %1386 = dma.done [#allocation3], 512
    $region69: #{tpu_custom_call.1} parent=1 // pred_fallthru
      _
    // Predicated region
    $region70: #{tpu_custom_call.1} parent=1 // pred_check
      _
    $region71: #{tpu_custom_call.1} parent=1 // pred_check_branch
      %1388 = sbr.rel (0) target = $region73
    $region72: #{tpu_custom_call.1} parent=1 // pred_region
      %1390 = dma.done [#allocation5], 256
    $region73: #{tpu_custom_call.1} parent=1 // pred_fallthru
      _
    %1391 = vsyncpa [#allocation3], 1
    %1392 = vsyncpa [#allocation5], 1

// kernel: tpu_custom_call.1
$region0: #{tpu_custom_call.1}
  #allocation0 [shape = 'u32[]', space=smem, size = 0x4, offset = 0x4, fixed_abs, tag = 'smem constant byte address 0x4 - core index']
  #allocation1 [shape = 'u32[72,128]{1,0:T(1,128)}', space=vmem, size = 0x9000, scoped, tag = 'internal scratch']
  %s0 = inlined_call_operand.vmem [shape: bf16[8,1024], index: 0, kind: input, shape index: {}]
  %s1 = inlined_call_operand.vmem [shape: f32[8,128], index: 1, kind: input, shape index: {}]
  %s2 = inlined_call_operand.vmem [shape: bf16[1024,64], index: 2, kind: input, shape index: {}]
  %s3 = inlined_call_operand.vmem [shape: f32[1,64], index: 3, kind: input, shape index: {}]
  %s4 = inlined_call_operand.vmem [shape: bf16[64,128], index: 4, kind: input, shape index: {}]
  %s5 = inlined_call_operand.vmem [shape: f32[1,128], index: 5, kind: input, shape index: {}]
  %s6 = inlined_call_operand.vmem [shape: bf16[128,32], index: 6, kind: input, shape index: {}]
  %s7 = inlined_call_operand.vmem [shape: f32[1,32], index: 7, kind: input, shape index: {}]
  %s8 = inlined_call_operand.vmem [shape: bf16[32,256], index: 8, kind: input, shape index: {}]
  %s9 = inlined_call_operand.vmem [shape: f32[1,256], index: 9, kind: input, shape index: {}]
  %s10 = inlined_call_operand.vmem [shape: bf16[128,64], index: 10, kind: input, shape index: {}]
  %s11 = inlined_call_operand.vmem [shape: f32[1,64], index: 11, kind: input, shape index: {}]
  %s12 = inlined_call_operand.vmem [shape: bf16[64,1024], index: 12, kind: input, shape index: {}]
  %s13 = inlined_call_operand.vmem [shape: f32[1,1024], index: 13, kind: input, shape index: {}]
  %s14 = inlined_call_operand.hbm [shape: bf16[8,1024], index: 14, kind: output, shape index: {0}]
  %s15 = inlined_call_operand.hbm [shape: f32[8,256], index: 15, kind: output, shape index: {1}]
  %16 = xla_tuple %s14, %s15
  %s17 = sld [smem:[#allocation0]]
  $region74: #{tpu_custom_call.1} parent=0
    _
  %s19 = ssub.s32 1, %s17
  %s20 = scalar_select 0, %s19, %s17
  $region1: #{tpu_custom_call.1} parent=0
    #allocation2 [shape = 'u8[16384]{0}', space=vmem, size = 0x4000, scoped, tag = 'output window, operand 0, single buffered']
    #allocation3 [shape = 's32[1]{0}', space=sflag, size = 0x4, scoped, tag = 'scoped memory for tpu_custom_call.1']
    #allocation4 [shape = 'u8[8192]{0}', space=vmem, size = 0x2000, scoped, tag = 'output window, operand 1, single buffered']
    #allocation5 [shape = 's32[1]{0}', space=sflag, size = 0x4, scoped, tag = 'scoped memory for tpu_custom_call.1']
    %21 = vsyncpa [#allocation3], 0
    %22 = vsyncpa [#allocation5], 0
    // Predicated region
    $region2: #{tpu_custom_call.1} parent=1 // pred_check
      _
    $region3: #{tpu_custom_call.1} parent=1 // pred_check_branch
      %24 = sbr.rel (0) target = $region5
    $region4: #{tpu_custom_call.1} parent=1 // pred_region
      _
    $region5: #{tpu_custom_call.1} parent=1 // pred_fallthru
      _
    // Predicated region
    $region6: #{tpu_custom_call.1} parent=1 // pred_check
      _
    $region7: #{tpu_custom_call.1} parent=1 // pred_check_branch
      %26 = sbr.rel (0) target = $region9
    $region8: #{tpu_custom_call.1} parent=1 // pred_region
      _
    $region9: #{tpu_custom_call.1} parent=1 // pred_fallthru
      _
    // Predicated region
    $region10: #{tpu_custom_call.1} parent=1 // pred_check
      _
    $region11: #{tpu_custom_call.1} parent=1 // pred_check_branch
      %28 = sbr.rel (0) target = $region13
    $region12: #{tpu_custom_call.1} parent=1 // pred_region
      _
    $region13: #{tpu_custom_call.1} parent=1 // pred_fallthru
      _
    // Predicated region
    $region14: #{tpu_custom_call.1} parent=1 // pred_check
      _
    $region15: #{tpu_custom_call.1} parent=1 // pred_check_branch
      %30 = sbr.rel (0) target = $region17
    $region16: #{tpu_custom_call.1} parent=1 // pred_region
      _
    $region17: #{tpu_custom_call.1} parent=1 // pred_fallthru
      _
    // Predicated region
    $region18: #{tpu_custom_call.1} parent=1 // pred_check
      _
    $region19: #{tpu_custom_call.1} parent=1 // pred_check_branch
      %32 = sbr.rel (0) target = $region21
    $region20: #{tpu_custom_call.1} parent=1 // pred_region
      _
    $region21: #{tpu_custom_call.1} parent=1 // pred_fallthru
      _
    // Predicated region
    $region22: #{tpu_custom_call.1} parent=1 // pred_check
      _
    $region23: #{tpu_custom_call.1} parent=1 // pred_check_branch
      %34 = sbr.rel (0) target = $region25
    $region24: #{tpu_custom_call.1} parent=1 // pred_region
      _
    $region25: #{tpu_custom_call.1} parent=1 // pred_fallthru
      _
    // Predicated region
    $region26: #{tpu_custom_call.1} parent=1 // pred_check
      _
    $region27: #{tpu_custom_call.1} parent=1 // pred_check_branch
      %36 = sbr.rel (0) target = $region29
    $region28: #{tpu_custom_call.1} parent=1 // pred_region
      _
    $region29: #{tpu_custom_call.1} parent=1 // pred_fallthru
      _
    // Predicated region
    $region30: #{tpu_custom_call.1} parent=1 // pred_check
      _
    $region31: #{tpu_custom_call.1} parent=1 // pred_check_branch
      %38 = sbr.rel (0) target = $region33
    $region32: #{tpu_custom_call.1} parent=1 // pred_region
      _
    $region33: #{tpu_custom_call.1} parent=1 // pred_fallthru
      _
    // Predicated region
    $region34: #{tpu_custom_call.1} parent=1 // pred_check
      _
    $region35: #{tpu_custom_call.1} parent=1 // pred_check_branch
      %40 = sbr.rel (0) target = $region37
    $region36: #{tpu_custom_call.1} parent=1 // pred_region
      _
    $region37: #{tpu_custom_call.1} parent=1 // pred_fallthru
      _
    // Predicated region
    $region38: #{tpu_custom_call.1} parent=1 // pred_check
      _
    $region39: #{tpu_custom_call.1} parent=1 // pred_check_branch
      %42 = sbr.rel (0) target = $region41
    $region40: #{tpu_custom_call.1} parent=1 // pred_region
      _
    $region41: #{tpu_custom_call.1} parent=1 // pred_fallthru
      _
    // Predicated region
    $region42: #{tpu_custom_call.1} parent=1 // pred_check
      _
    $region43: #{tpu_custom_call.1} parent=1 // pred_check_branch
      %44 = sbr.rel (0) target = $region45
    $region44: #{tpu_custom_call.1} parent=1 // pred_region
      _
    $region45: #{tpu_custom_call.1} parent=1 // pred_fallthru
      _
    // Predicated region
    $region46: #{tpu_custom_call.1} parent=1 // pred_check
      _
    $region47: #{tpu_custom_call.1} parent=1 // pred_check_branch
      %46 = sbr.rel (0) target = $region49
    $region48: #{tpu_custom_call.1} parent=1 // pred_region
      _
    $region49: #{tpu_custom_call.1} parent=1 // pred_fallthru
      _
    // Predicated region
    $region50: #{tpu_custom_call.1} parent=1 // pred_check
      _
    $region51: #{tpu_custom_call.1} parent=1 // pred_check_branch
      %48 = sbr.rel (0) target = $region53
    $region52: #{tpu_custom_call.1} parent=1 // pred_region
      _
    $region53: #{tpu_custom_call.1} parent=1 // pred_fallthru
      _
    // Predicated region
    $region54: #{tpu_custom_call.1} parent=1 // pred_check
      _
    $region55: #{tpu_custom_call.1} parent=1 // pred_check_branch
      %50 = sbr.rel (0) target = $region57
    $region56: #{tpu_custom_call.1} parent=1 // pred_region
      _
    $region57: #{tpu_custom_call.1} parent=1 // pred_fallthru
      _
    %v52 = vld [vmem:[%s0] sm:$0xff]
    %v53 = vld [vmem:[%s0 + $0x8] sm:$0xff]
    %v54 = vld [vmem:[%s0 + $0x10] sm:$0xff]
    %v55 = vld [vmem:[%s0 + $0x18] sm:$0xff]
    %v56 = vld [vmem:[%s2] sm:$0xf]
    %v57 = vld [vmem:[%s2 + $0x4] sm:$0xf]
    %v58 = vld [vmem:[%s2 + $0x8] sm:$0xf]
    %v59 = vld [vmem:[%s2 + $0xc] sm:$0xf]
    %v60 = vld [vmem:[%s2 + $0x10] sm:$0xf]
    %v61 = vld [vmem:[%s2 + $0x14] sm:$0xf]
    %v62 = vld [vmem:[%s2 + $0x18] sm:$0xf]
    %v63 = vld [vmem:[%s2 + $0x1c] sm:$0xf]
    %v64 = vld [vmem:[%s2 + $0x20] sm:$0xf]
    %v65 = vld [vmem:[%s2 + $0x24] sm:$0xf]
    %v66 = vld [vmem:[%s2 + $0x28] sm:$0xf]
    %v67 = vld [vmem:[%s2 + $0x2c] sm:$0xf]
    %v68 = vld [vmem:[%s2 + $0x30] sm:$0xf]
    %v69 = vld [vmem:[%s2 + $0x34] sm:$0xf]
    %v70 = vld [vmem:[%s2 + $0x38] sm:$0xf]
    %v71 = vld [vmem:[%s2 + $0x3c] sm:$0xf]
    %v72 = vld [vmem:[%s2 + $0x40] sm:$0xf]
    %v73 = vld [vmem:[%s2 + $0x44] sm:$0xf]
    %v74 = vld [vmem:[%s2 + $0x48] sm:$0xf]
    %v75 = vld [vmem:[%s2 + $0x4c] sm:$0xf]
    %v76 = vld [vmem:[%s2 + $0x50] sm:$0xf]
    %v77 = vld [vmem:[%s2 + $0x54] sm:$0xf]
    %v78 = vld [vmem:[%s2 + $0x58] sm:$0xf]
    %v79 = vld [vmem:[%s2 + $0x5c] sm:$0xf]
    %v80 = vld [vmem:[%s2 + $0x60] sm:$0xf]
    %v81 = vld [vmem:[%s2 + $0x64] sm:$0xf]
    %v82 = vld [vmem:[%s2 + $0x68] sm:$0xf]
    %v83 = vld [vmem:[%s2 + $0x6c] sm:$0xf]
    %v84 = vld [vmem:[%s2 + $0x70] sm:$0xf]
    %v85 = vld [vmem:[%s2 + $0x74] sm:$0xf]
    %v86 = vld [vmem:[%s2 + $0x78] sm:$0xf]
    %v87 = vld [vmem:[%s2 + $0x7c] sm:$0xf]
    %v88 = vld [vmem:[%s2 + $0x80] sm:$0xf]
    %v89 = vld [vmem:[%s2 + $0x84] sm:$0xf]
    %v90 = vld [vmem:[%s2 + $0x88] sm:$0xf]
    %v91 = vld [vmem:[%s2 + $0x8c] sm:$0xf]
    %v92 = vld [vmem:[%s2 + $0x90] sm:$0xf]
    %v93 = vld [vmem:[%s2 + $0x94] sm:$0xf]
    %v94 = vld [vmem:[%s2 + $0x98] sm:$0xf]
    %v95 = vld [vmem:[%s2 + $0x9c] sm:$0xf]
    %v96 = vld [vmem:[%s2 + $0xa0] sm:$0xf]
    %v97 = vld [vmem:[%s2 + $0xa4] sm:$0xf]
    %v98 = vld [vmem:[%s2 + $0xa8] sm:$0xf]
    %v99 = vld [vmem:[%s2 + $0xac] sm:$0xf]
    %v100 = vld [vmem:[%s2 + $0xb0] sm:$0xf]
    %v101 = vld [vmem:[%s2 + $0xb4] sm:$0xf]
    %v102 = vld [vmem:[%s2 + $0xb8] sm:$0xf]
    %v103 = vld [vmem:[%s2 + $0xbc] sm:$0xf]
    %v104 = vld [vmem:[%s2 + $0xc0] sm:$0xf]
    %v105 = vld [vmem:[%s2 + $0xc4] sm:$0xf]
    %v106 = vld [vmem:[%s2 + $0xc8] sm:$0xf]
    %v107 = vld [vmem:[%s2 + $0xcc] sm:$0xf]
    %v108 = vld [vmem:[%s2 + $0xd0] sm:$0xf]
    %v109 = vld [vmem:[%s2 + $0xd4] sm:$0xf]
    %v110 = vld [vmem:[%s2 + $0xd8] sm:$0xf]
    %v111 = vld [vmem:[%s2 + $0xdc] sm:$0xf]
    %v112 = vld [vmem:[%s2 + $0xe0] sm:$0xf]
    %v113 = vld [vmem:[%s2 + $0xe4] sm:$0xf]
    %v114 = vld [vmem:[%s2 + $0xe8] sm:$0xf]
    %v115 = vld [vmem:[%s2 + $0xec] sm:$0xf]
    %v116 = vld [vmem:[%s2 + $0xf0] sm:$0xf]
    %v117 = vld [vmem:[%s2 + $0xf4] sm:$0xf]
    %v118 = vld [vmem:[%s2 + $0xf8] sm:$0xf]
    %v119 = vld [vmem:[%s2 + $0xfc] sm:$0xf]
    %v120 = vld [vmem:[%s2 + $0x100] sm:$0xf]
    %v121 = vld [vmem:[%s2 + $0x104] sm:$0xf]
    %v122 = vld [vmem:[%s2 + $0x108] sm:$0xf]
    %v123 = vld [vmem:[%s2 + $0x10c] sm:$0xf]
    %v124 = vld [vmem:[%s2 + $0x110] sm:$0xf]
    %v125 = vld [vmem:[%s2 + $0x114] sm:$0xf]
    %v126 = vld [vmem:[%s2 + $0x118] sm:$0xf]
    %v127 = vld [vmem:[%s2 + $0x11c] sm:$0xf]
    %v128 = vld [vmem:[%s2 + $0x120] sm:$0xf]
    %v129 = vld [vmem:[%s2 + $0x124] sm:$0xf]
    %v130 = vld [vmem:[%s2 + $0x128] sm:$0xf]
    %v131 = vld [vmem:[%s2 + $0x12c] sm:$0xf]
    %v132 = vld [vmem:[%s2 + $0x130] sm:$0xf]
    %v133 = vld [vmem:[%s2 + $0x134] sm:$0xf]
    %v134 = vld [vmem:[%s2 + $0x138] sm:$0xf]
    %v135 = vld [vmem:[%s2 + $0x13c] sm:$0xf]
    %v136 = vld [vmem:[%s2 + $0x140] sm:$0xf]
    %v137 = vld [vmem:[%s2 + $0x144] sm:$0xf]
    %v138 = vld [vmem:[%s2 + $0x148] sm:$0xf]
    %v139 = vld [vmem:[%s2 + $0x14c] sm:$0xf]
    %v140 = vld [vmem:[%s2 + $0x150] sm:$0xf]
    %v141 = vld [vmem:[%s2 + $0x154] sm:$0xf]
    %v142 = vld [vmem:[%s2 + $0x158] sm:$0xf]
    %v143 = vld [vmem:[%s2 + $0x15c] sm:$0xf]
    %v144 = vld [vmem:[%s2 + $0x160] sm:$0xf]
    %v145 = vld [vmem:[%s2 + $0x164] sm:$0xf]
    %v146 = vld [vmem:[%s2 + $0x168] sm:$0xf]
    %v147 = vld [vmem:[%s2 + $0x16c] sm:$0xf]
    %v148 = vld [vmem:[%s2 + $0x170] sm:$0xf]
    %v149 = vld [vmem:[%s2 + $0x174] sm:$0xf]
    %v150 = vld [vmem:[%s2 + $0x178] sm:$0xf]
    %v151 = vld [vmem:[%s2 + $0x17c] sm:$0xf]
    %v152 = vld [vmem:[%s2 + $0x180] sm:$0xf]
    %v153 = vld [vmem:[%s2 + $0x184] sm:$0xf]
    %v154 = vld [vmem:[%s2 + $0x188] sm:$0xf]
    %v155 = vld [vmem:[%s2 + $0x18c] sm:$0xf]
    %v156 = vld [vmem:[%s2 + $0x190] sm:$0xf]
    %v157 = vld [vmem:[%s2 + $0x194] sm:$0xf]
    %v158 = vld [vmem:[%s2 + $0x198] sm:$0xf]
    %v159 = vld [vmem:[%s2 + $0x19c] sm:$0xf]
    %v160 = vld [vmem:[%s2 + $0x1a0] sm:$0xf]
    %v161 = vld [vmem:[%s2 + $0x1a4] sm:$0xf]
    %v162 = vld [vmem:[%s2 + $0x1a8] sm:$0xf]
    %v163 = vld [vmem:[%s2 + $0x1ac] sm:$0xf]
    %v164 = vld [vmem:[%s2 + $0x1b0] sm:$0xf]
    %v165 = vld [vmem:[%s2 + $0x1b4] sm:$0xf]
    %v166 = vld [vmem:[%s2 + $0x1b8] sm:$0xf]
    %v167 = vld [vmem:[%s2 + $0x1bc] sm:$0xf]
    %v168 = vld [vmem:[%s2 + $0x1c0] sm:$0xf]
    %v169 = vld [vmem:[%s2 + $0x1c4] sm:$0xf]
    %v170 = vld [vmem:[%s2 + $0x1c8] sm:$0xf]
    %v171 = vld [vmem:[%s2 + $0x1cc] sm:$0xf]
    %v172 = vld [vmem:[%s2 + $0x1d0] sm:$0xf]
    %v173 = vld [vmem:[%s2 + $0x1d4] sm:$0xf]
    %v174 = vld [vmem:[%s2 + $0x1d8] sm:$0xf]
    %v175 = vld [vmem:[%s2 + $0x1dc] sm:$0xf]
    %v176 = vld [vmem:[%s2 + $0x1e0] sm:$0xf]
    %v177 = vld [vmem:[%s2 + $0x1e4] sm:$0xf]
    %v178 = vld [vmem:[%s2 + $0x1e8] sm:$0xf]
    %v179 = vld [vmem:[%s2 + $0x1ec] sm:$0xf]
    %v180 = vld [vmem:[%s2 + $0x1f0] sm:$0xf]
    %v181 = vld [vmem:[%s2 + $0x1f4] sm:$0xf]
    %v182 = vld [vmem:[%s2 + $0x1f8] sm:$0xf]
    %v183 = vld [vmem:[%s2 + $0x1fc] sm:$0xf]
    %v184 = vld [vmem:[%s3] sm:$0x1]
    %v186 = vperm.slane %v184, 0
    %v192 = vunpack.c.l.b16 %v52
    %v193 = vunpack.c.h.b16 %v52
    %v194 = vunpack.c.l.b16 %v53
    %v195 = vunpack.c.h.b16 %v53
    %v196 = vunpack.c.l.b16 %v54
    %v197 = vunpack.c.h.b16 %v54
    %v198 = vunpack.c.l.b16 %v55
    %v199 = vunpack.c.h.b16 %v55
    %v200 = vpack.c.b16 %v192, %v192
    %v201 = vpack.c.b16 %v193, %v193
    %v202 = vpack.c.b16 %v194, %v194
    %v203 = vpack.c.b16 %v195, %v195
    %v204 = vpack.c.b16 %v196, %v196
    %v205 = vpack.c.b16 %v197, %v197
    %v206 = vpack.c.b16 %v198, %v198
    %v207 = vpack.c.b16 %v199, %v199
    %v344 = vunpack.c.l.b16 %v56
    %v345 = vunpack.c.l.b16 %v57
    %v346 = vunpack.c.l.b16 %v58
    %v347 = vunpack.c.l.b16 %v59
    %v348 = vunpack.c.l.b16 %v60
    %v349 = vunpack.c.l.b16 %v61
    %v350 = vunpack.c.l.b16 %v62
    %v351 = vunpack.c.l.b16 %v63
    %v352 = vunpack.c.l.b16 %v64
    %v353 = vunpack.c.l.b16 %v65
    %v354 = vunpack.c.l.b16 %v66
    %v355 = vunpack.c.l.b16 %v67
    %v356 = vunpack.c.l.b16 %v68
    %v357 = vunpack.c.l.b16 %v69
    %v358 = vunpack.c.l.b16 %v70
    %v359 = vunpack.c.l.b16 %v71
    %v360 = vunpack.c.l.b16 %v72
    %v361 = vunpack.c.l.b16 %v73
    %v362 = vunpack.c.l.b16 %v74
    %v363 = vunpack.c.l.b16 %v75
    %v364 = vunpack.c.l.b16 %v76
    %v365 = vunpack.c.l.b16 %v77
    %v366 = vunpack.c.l.b16 %v78
    %v367 = vunpack.c.l.b16 %v79
    %v368 = vunpack.c.l.b16 %v80
    %v369 = vunpack.c.l.b16 %v81
    %v370 = vunpack.c.l.b16 %v82
    %v371 = vunpack.c.l.b16 %v83
    %v372 = vunpack.c.l.b16 %v84
    %v373 = vunpack.c.l.b16 %v85
    %v374 = vunpack.c.l.b16 %v86
    %v375 = vunpack.c.l.b16 %v87
    %v376 = vunpack.c.l.b16 %v88
    %v377 = vunpack.c.l.b16 %v89
    %v378 = vunpack.c.l.b16 %v90
    %v379 = vunpack.c.l.b16 %v91
    %v380 = vunpack.c.l.b16 %v92
    %v381 = vunpack.c.l.b16 %v93
    %v382 = vunpack.c.l.b16 %v94
    %v383 = vunpack.c.l.b16 %v95
    %v384 = vunpack.c.l.b16 %v96
    %v385 = vunpack.c.l.b16 %v97
    %v386 = vunpack.c.l.b16 %v98
    %v387 = vunpack.c.l.b16 %v99
    %v388 = vunpack.c.l.b16 %v100
    %v389 = vunpack.c.l.b16 %v101
    %v390 = vunpack.c.l.b16 %v102
    %v391 = vunpack.c.l.b16 %v103
    %v392 = vunpack.c.l.b16 %v104
    %v393 = vunpack.c.l.b16 %v105
    %v394 = vunpack.c.l.b16 %v106
    %v395 = vunpack.c.l.b16 %v107
    %v396 = vunpack.c.l.b16 %v108
    %v397 = vunpack.c.l.b16 %v109
    %v398 = vunpack.c.l.b16 %v110
    %v399 = vunpack.c.l.b16 %v111
    %v400 = vunpack.c.l.b16 %v112
    %v401 = vunpack.c.l.b16 %v113
    %v402 = vunpack.c.l.b16 %v114
    %v403 = vunpack.c.l.b16 %v115
    %v404 = vunpack.c.l.b16 %v116
    %v405 = vunpack.c.l.b16 %v117
    %v406 = vunpack.c.l.b16 %v118
    %v407 = vunpack.c.l.b16 %v119
    %v408 = vunpack.c.l.b16 %v120
    %v409 = vunpack.c.l.b16 %v121
    %v410 = vunpack.c.l.b16 %v122
    %v411 = vunpack.c.l.b16 %v123
    %v412 = vunpack.c.l.b16 %v124
    %v413 = vunpack.c.l.b16 %v125
    %v414 = vunpack.c.l.b16 %v126
    %v415 = vunpack.c.l.b16 %v127
    %v416 = vunpack.c.l.b16 %v128
    %v417 = vunpack.c.l.b16 %v129
    %v418 = vunpack.c.l.b16 %v130
    %v419 = vunpack.c.l.b16 %v131
    %v420 = vunpack.c.l.b16 %v132
    %v421 = vunpack.c.l.b16 %v133
    %v422 = vunpack.c.l.b16 %v134
    %v423 = vunpack.c.l.b16 %v135
    %v424 = vunpack.c.l.b16 %v136
    %v425 = vunpack.c.l.b16 %v137
    %v426 = vunpack.c.l.b16 %v138
    %v427 = vunpack.c.l.b16 %v139
    %v428 = vunpack.c.l.b16 %v140
    %v429 = vunpack.c.l.b16 %v141
    %v430 = vunpack.c.l.b16 %v142
    %v431 = vunpack.c.l.b16 %v143
    %v432 = vunpack.c.l.b16 %v144
    %v433 = vunpack.c.l.b16 %v145
    %v434 = vunpack.c.l.b16 %v146
    %v435 = vunpack.c.l.b16 %v147
    %v436 = vunpack.c.l.b16 %v148
    %v437 = vunpack.c.l.b16 %v149
    %v438 = vunpack.c.l.b16 %v150
    %v439 = vunpack.c.l.b16 %v151
    %v440 = vunpack.c.l.b16 %v152
    %v441 = vunpack.c.l.b16 %v153
    %v442 = vunpack.c.l.b16 %v154
    %v443 = vunpack.c.l.b16 %v155
    %v444 = vunpack.c.l.b16 %v156
    %v445 = vunpack.c.l.b16 %v157
    %v446 = vunpack.c.l.b16 %v158
    %v447 = vunpack.c.l.b16 %v159
    %v448 = vunpack.c.l.b16 %v160
    %v449 = vunpack.c.l.b16 %v161
    %v450 = vunpack.c.l.b16 %v162
    %v451 = vunpack.c.l.b16 %v163
    %v452 = vunpack.c.l.b16 %v164
    %v453 = vunpack.c.l.b16 %v165
    %v454 = vunpack.c.l.b16 %v166
    %v455 = vunpack.c.l.b16 %v167
    %v456 = vunpack.c.l.b16 %v168
    %v457 = vunpack.c.l.b16 %v169
    %v458 = vunpack.c.l.b16 %v170
    %v459 = vunpack.c.l.b16 %v171
    %v460 = vunpack.c.l.b16 %v172
    %v461 = vunpack.c.l.b16 %v173
    %v462 = vunpack.c.l.b16 %v174
    %v463 = vunpack.c.l.b16 %v175
    %v464 = vunpack.c.l.b16 %v176
    %v465 = vunpack.c.l.b16 %v177
    %v466 = vunpack.c.l.b16 %v178
    %v467 = vunpack.c.l.b16 %v179
    %v468 = vunpack.c.l.b16 %v180
    %v469 = vunpack.c.l.b16 %v181
    %v470 = vunpack.c.l.b16 %v182
    %v471 = vunpack.c.l.b16 %v183
    %v472 = vpack.c.b16 %v345, %v344
    %v473 = vpack.c.b16 %v347, %v346
    %v474 = vpack.c.b16 %v349, %v348
    %v475 = vpack.c.b16 %v351, %v350
    %v476 = vpack.c.b16 %v353, %v352
    %v477 = vpack.c.b16 %v355, %v354
    %v478 = vpack.c.b16 %v357, %v356
    %v479 = vpack.c.b16 %v359, %v358
    %v480 = vpack.c.b16 %v361, %v360
    %v481 = vpack.c.b16 %v363, %v362
    %v482 = vpack.c.b16 %v365, %v364
    %v483 = vpack.c.b16 %v367, %v366
    %v484 = vpack.c.b16 %v369, %v368
    %v485 = vpack.c.b16 %v371, %v370
    %v486 = vpack.c.b16 %v373, %v372
    %v487 = vpack.c.b16 %v375, %v374
    %v488 = vpack.c.b16 %v377, %v376
    %v489 = vpack.c.b16 %v379, %v378
    %v490 = vpack.c.b16 %v381, %v380
    %v491 = vpack.c.b16 %v383, %v382
    %v492 = vpack.c.b16 %v385, %v384
    %v493 = vpack.c.b16 %v387, %v386
    %v494 = vpack.c.b16 %v389, %v388
    %v495 = vpack.c.b16 %v391, %v390
    %v496 = vpack.c.b16 %v393, %v392
    %v497 = vpack.c.b16 %v395, %v394
    %v498 = vpack.c.b16 %v397, %v396
    %v499 = vpack.c.b16 %v399, %v398
    %v500 = vpack.c.b16 %v401, %v400
    %v501 = vpack.c.b16 %v403, %v402
    %v502 = vpack.c.b16 %v405, %v404
    %v503 = vpack.c.b16 %v407, %v406
    %v504 = vpack.c.b16 %v409, %v408
    %v505 = vpack.c.b16 %v411, %v410
    %v506 = vpack.c.b16 %v413, %v412
    %v507 = vpack.c.b16 %v415, %v414
    %v508 = vpack.c.b16 %v417, %v416
    %v509 = vpack.c.b16 %v419, %v418
    %v510 = vpack.c.b16 %v421, %v420
    %v511 = vpack.c.b16 %v423, %v422
    %v512 = vpack.c.b16 %v425, %v424
    %v513 = vpack.c.b16 %v427, %v426
    %v514 = vpack.c.b16 %v429, %v428
    %v515 = vpack.c.b16 %v431, %v430
    %v516 = vpack.c.b16 %v433, %v432
    %v517 = vpack.c.b16 %v435, %v434
    %v518 = vpack.c.b16 %v437, %v436
    %v519 = vpack.c.b16 %v439, %v438
    %v520 = vpack.c.b16 %v441, %v440
    %v521 = vpack.c.b16 %v443, %v442
    %v522 = vpack.c.b16 %v445, %v444
    %v523 = vpack.c.b16 %v447, %v446
    %v524 = vpack.c.b16 %v449, %v448
    %v525 = vpack.c.b16 %v451, %v450
    %v526 = vpack.c.b16 %v453, %v452
    %v527 = vpack.c.b16 %v455, %v454
    %v528 = vpack.c.b16 %v457, %v456
    %v529 = vpack.c.b16 %v459, %v458
    %v530 = vpack.c.b16 %v461, %v460
    %v531 = vpack.c.b16 %v463, %v462
    %v532 = vpack.c.b16 %v465, %v464
    %v533 = vpack.c.b16 %v467, %v466
    %v534 = vpack.c.b16 %v469, %v468
    %v535 = vpack.c.b16 %v471, %v470
    %600 = vmatpush.bf16.msra.mxu0 %v479
    %601 = vmatpush.bf16.msra.mxu0 %v478
    %602 = vmatpush.bf16.msra.mxu0 %v477
    %603 = vmatpush.bf16.msra.mxu0 %v476
    %604 = vmatpush.bf16.msra.mxu0 %v475
    %605 = vmatpush.bf16.msra.mxu0 %v474
    %606 = vmatpush.bf16.msra.mxu0 %v473
    %607 = vmatpush.bf16.msra.mxu0 %v472
    %608 = vmatmul.bf16.gmra.mxu0 %v200
    %v609 = vpop.f32.mrf.mxu0
    %v610 = vadd.f32 %v186, %v609
    %v611 = vpop.f32.mrf.mxu0
    %612 = vdwg.mxu0
    %613 = vmatpush.bf16.msra.mxu0 %v487
    %614 = vmatpush.bf16.msra.mxu0 %v486
    %615 = vmatpush.bf16.msra.mxu0 %v485
    %616 = vmatpush.bf16.msra.mxu0 %v484
    %617 = vmatpush.bf16.msra.mxu0 %v483
    %618 = vmatpush.bf16.msra.mxu0 %v482
    %619 = vmatpush.bf16.msra.mxu0 %v481
    %620 = vmatpush.bf16.msra.mxu0 %v480
    %621 = vmatmul.bf16.gmra.mxu0 %v201
    %v622 = vpop.f32.mrf.mxu0
    %v623 = vadd.f32 %v610, %v622
    %v624 = vpop.f32.mrf.mxu0
    %625 = vdwg.mxu0
    %626 = vmatpush.bf16.msra.mxu0 %v495
    %627 = vmatpush.bf16.msra.mxu0 %v494
    %628 = vmatpush.bf16.msra.mxu0 %v493
    %629 = vmatpush.bf16.msra.mxu0 %v492
    %630 = vmatpush.bf16.msra.mxu0 %v491
    %631 = vmatpush.bf16.msra.mxu0 %v490
    %632 = vmatpush.bf16.msra.mxu0 %v489
    %633 = vmatpush.bf16.msra.mxu0 %v488
    %634 = vmatmul.bf16.gmra.mxu0 %v202
    %v635 = vpop.f32.mrf.mxu0
    %v636 = vadd.f32 %v623, %v635
    %v637 = vpop.f32.mrf.mxu0
    %638 = vdwg.mxu0
    %639 = vmatpush.bf16.msra.mxu0 %v503
    %640 = vmatpush.bf16.msra.mxu0 %v502
    %641 = vmatpush.bf16.msra.mxu0 %v501
    %642 = vmatpush.bf16.msra.mxu0 %v500
    %643 = vmatpush.bf16.msra.mxu0 %v499
    %644 = vmatpush.bf16.msra.mxu0 %v498
    %645 = vmatpush.bf16.msra.mxu0 %v497
    %646 = vmatpush.bf16.msra.mxu0 %v496
    %647 = vmatmul.bf16.gmra.mxu0 %v203
    %v648 = vpop.f32.mrf.mxu0
    %v649 = vadd.f32 %v636, %v648
    %v650 = vpop.f32.mrf.mxu0
    %651 = vdwg.mxu0
    %652 = vmatpush.bf16.msra.mxu0 %v511
    %653 = vmatpush.bf16.msra.mxu0 %v510
    %654 = vmatpush.bf16.msra.mxu0 %v509
    %655 = vmatpush.bf16.msra.mxu0 %v508
    %656 = vmatpush.bf16.msra.mxu0 %v507
    %657 = vmatpush.bf16.msra.mxu0 %v506
    %658 = vmatpush.bf16.msra.mxu0 %v505
    %659 = vmatpush.bf16.msra.mxu0 %v504
    %660 = vmatmul.bf16.gmra.mxu0 %v204
    %v661 = vpop.f32.mrf.mxu0
    %v662 = vadd.f32 %v649, %v661
    %v663 = vpop.f32.mrf.mxu0
    %664 = vdwg.mxu0
    %665 = vmatpush.bf16.msra.mxu0 %v519
    %666 = vmatpush.bf16.msra.mxu0 %v518
    %667 = vmatpush.bf16.msra.mxu0 %v517
    %668 = vmatpush.bf16.msra.mxu0 %v516
    %669 = vmatpush.bf16.msra.mxu0 %v515
    %670 = vmatpush.bf16.msra.mxu0 %v514
    %671 = vmatpush.bf16.msra.mxu0 %v513
    %672 = vmatpush.bf16.msra.mxu0 %v512
    %673 = vmatmul.bf16.gmra.mxu0 %v205
    %v674 = vpop.f32.mrf.mxu0
    %v675 = vadd.f32 %v662, %v674
    %v676 = vpop.f32.mrf.mxu0
    %677 = vdwg.mxu0
    %678 = vmatpush.bf16.msra.mxu0 %v527
    %679 = vmatpush.bf16.msra.mxu0 %v526
    %680 = vmatpush.bf16.msra.mxu0 %v525
    %681 = vmatpush.bf16.msra.mxu0 %v524
    %682 = vmatpush.bf16.msra.mxu0 %v523
    %683 = vmatpush.bf16.msra.mxu0 %v522
    %684 = vmatpush.bf16.msra.mxu0 %v521
    %685 = vmatpush.bf16.msra.mxu0 %v520
    %686 = vmatmul.bf16.gmra.mxu0 %v206
    %v687 = vpop.f32.mrf.mxu0
    %v688 = vadd.f32 %v675, %v687
    %v689 = vpop.f32.mrf.mxu0
    %690 = vdwg.mxu0
    %691 = vmatpush.bf16.msra.mxu0 %v535
    %692 = vmatpush.bf16.msra.mxu0 %v534
    %693 = vmatpush.bf16.msra.mxu0 %v533
    %694 = vmatpush.bf16.msra.mxu0 %v532
    %695 = vmatpush.bf16.msra.mxu0 %v531
    %696 = vmatpush.bf16.msra.mxu0 %v530
    %697 = vmatpush.bf16.msra.mxu0 %v529
    %698 = vmatpush.bf16.msra.mxu0 %v528
    %699 = vmatmul.bf16.gmra.mxu0 %v207
    %v700 = vpop.f32.mrf.mxu0
    %v701 = vadd.f32 %v688, %v700
    %v702 = vpop.f32.mrf.mxu0
    %703 = vdwg.mxu0
    %v704 = vmax.f32 %v701, 0.0
    %v705 = vpack.c.bf16 %v704, %v704
    %v706 = vld [vmem:[%s4] sm:$0xf]
    %v707 = vld [vmem:[%s4 + $0x4] sm:$0xf]
    %v708 = vld [vmem:[%s4 + $0x8] sm:$0xf]
    %v709 = vld [vmem:[%s4 + $0xc] sm:$0xf]
    %v710 = vld [vmem:[%s4 + $0x10] sm:$0xf]
    %v711 = vld [vmem:[%s4 + $0x14] sm:$0xf]
    %v712 = vld [vmem:[%s4 + $0x18] sm:$0xf]
    %v713 = vld [vmem:[%s4 + $0x1c] sm:$0xf]
    %v714 = vld [vmem:[%s5] sm:$0x1]
    %v716 = vperm.slane %v714, 0
    %v726 = vunpack.c.l.b16 %v706
    %v727 = vunpack.c.l.b16 %v707
    %v728 = vunpack.c.l.b16 %v708
    %v729 = vunpack.c.l.b16 %v709
    %v730 = vunpack.c.l.b16 %v710
    %v731 = vunpack.c.l.b16 %v711
    %v732 = vunpack.c.l.b16 %v712
    %v733 = vunpack.c.l.b16 %v713
    %v734 = vpack.c.b16 %v727, %v726
    %v735 = vpack.c.b16 %v729, %v728
    %v736 = vpack.c.b16 %v731, %v730
    %v737 = vpack.c.b16 %v733, %v732
    %vm742 = vcmask 523264
    %v744 = vsel %vm742, %v705, 0
    %746 = vmatpush.bf16.msra.mxu0 0
    %747 = vmatpush.bf16.msra.mxu0 0
    %748 = vmatpush.bf16.msra.mxu0 0
    %749 = vmatpush.bf16.msra.mxu0 0
    %750 = vmatpush.bf16.msra.mxu0 %v737
    %751 = vmatpush.bf16.msra.mxu0 %v736
    %752 = vmatpush.bf16.msra.mxu0 %v735
    %753 = vmatpush.bf16.msra.mxu0 %v734
    %754 = vmatmul.bf16.gmra.mxu0 %v744
    %v755 = vpop.f32.mrf.mxu0
    %v756 = vadd.f32 %v716, %v755
    %v757 = vpop.f32.mrf.mxu0
    %758 = vdwg.mxu0
    %v759 = vmax.f32 %v756, 0.0
    %v760 = vpack.c.bf16 %v759, %v759
    %v761 = vld [vmem:[%s6] sm:$0xf]
    %v762 = vld [vmem:[%s6 + $0x4] sm:$0xf]
    %v763 = vld [vmem:[%s6 + $0x8] sm:$0xf]
    %v764 = vld [vmem:[%s6 + $0xc] sm:$0xf]
    %v765 = vld [vmem:[%s6 + $0x10] sm:$0xf]
    %v766 = vld [vmem:[%s6 + $0x14] sm:$0xf]
    %v767 = vld [vmem:[%s6 + $0x18] sm:$0xf]
    %v768 = vld [vmem:[%s6 + $0x1c] sm:$0xf]
    %v769 = vld [vmem:[%s6 + $0x20] sm:$0xf]
    %v770 = vld [vmem:[%s6 + $0x24] sm:$0xf]
    %v771 = vld [vmem:[%s6 + $0x28] sm:$0xf]
    %v772 = vld [vmem:[%s6 + $0x2c] sm:$0xf]
    %v773 = vld [vmem:[%s6 + $0x30] sm:$0xf]
    %v774 = vld [vmem:[%s6 + $0x34] sm:$0xf]
    %v775 = vld [vmem:[%s6 + $0x38] sm:$0xf]
    %v776 = vld [vmem:[%s6 + $0x3c] sm:$0xf]
    %v777 = vld [vmem:[%s7] sm:$0x1]
    %v779 = vperm.slane %v777, 0
    %v797 = vunpack.c.l.b16 %v761
    %v798 = vunpack.c.l.b16 %v762
    %v799 = vunpack.c.l.b16 %v763
    %v800 = vunpack.c.l.b16 %v764
    %v801 = vunpack.c.l.b16 %v765
    %v802 = vunpack.c.l.b16 %v766
    %v803 = vunpack.c.l.b16 %v767
    %v804 = vunpack.c.l.b16 %v768
    %v805 = vunpack.c.l.b16 %v769
    %v806 = vunpack.c.l.b16 %v770
    %v807 = vunpack.c.l.b16 %v771
    %v808 = vunpack.c.l.b16 %v772
    %v809 = vunpack.c.l.b16 %v773
    %v810 = vunpack.c.l.b16 %v774
    %v811 = vunpack.c.l.b16 %v775
    %v812 = vunpack.c.l.b16 %v776
    %v813 = vpack.c.b16 %v798, %v797
    %v814 = vpack.c.b16 %v800, %v799
    %v815 = vpack.c.b16 %v802, %v801
    %v816 = vpack.c.b16 %v804, %v803
    %v817 = vpack.c.b16 %v806, %v805
    %v818 = vpack.c.b16 %v808, %v807
    %v819 = vpack.c.b16 %v810, %v809
    %v820 = vpack.c.b16 %v812, %v811
    %829 = vmatpush.bf16.msra.mxu0 %v820
    %830 = vmatpush.bf16.msra.mxu0 %v819
    %831 = vmatpush.bf16.msra.mxu0 %v818
    %832 = vmatpush.bf16.msra.mxu0 %v817
    %833 = vmatpush.bf16.msra.mxu0 %v816
    %834 = vmatpush.bf16.msra.mxu0 %v815
    %835 = vmatpush.bf16.msra.mxu0 %v814
    %836 = vmatpush.bf16.msra.mxu0 %v813
    %837 = vmatmul.bf16.gmra.mxu0 %v760
    %v838 = vpop.f32.mrf.mxu0
    %v839 = vadd.f32 %v779, %v838
    %v840 = vpop.f32.mrf.mxu0
    %841 = vdwg.mxu0
    %v842 = vmax.f32 %v839, 0.0
    %v843 = vpack.c.bf16 %v842, %v842
    %v844 = vld [vmem:[%s8] sm:$0xff]
    %v845 = vld [vmem:[%s8 + $0x8] sm:$0xff]
    %v846 = vld [vmem:[%s8 + $0x10] sm:$0xff]
    %v847 = vld [vmem:[%s8 + $0x18] sm:$0xff]
    %v848 = vld [vmem:[%s9] sm:$0x3]
    %v850 = vperm.slane %v848, 0
    %v851 = vperm.slane %v848, 1
    %v858 = vunpack.c.l.b16 %v844
    %v859 = vunpack.c.h.b16 %v844
    %v860 = vunpack.c.l.b16 %v845
    %v861 = vunpack.c.h.b16 %v845
    %v862 = vunpack.c.l.b16 %v846
    %v863 = vunpack.c.h.b16 %v846
    %v864 = vunpack.c.l.b16 %v847
    %v865 = vunpack.c.h.b16 %v847
    %v866 = vpack.c.b16 %v860, %v858
    %v867 = vpack.c.b16 %v861, %v859
    %v868 = vpack.c.b16 %v864, %v862
    %v869 = vpack.c.b16 %v865, %v863
    %vm874 = vcmask 261120
    %v876 = vsel %vm874, %v843, 0
    %878 = vmatpush.bf16.msra.mxu0 0
    %879 = vmatpush.bf16.msra.mxu0 0
    %880 = vmatpush.bf16.msra.mxu0 0
    %881 = vmatpush.bf16.msra.mxu0 0
    %882 = vmatpush.bf16.msra.mxu0 0
    %883 = vmatpush.bf16.msra.mxu0 0
    %884 = vmatpush.bf16.msra.mxu0 %v868
    %885 = vmatpush.bf16.msra.mxu0 %v866
    %886 = vmatmul.bf16.gmra.mxu0 %v876
    %v887 = vpop.f32.mrf.mxu0
    %v888 = vadd.f32 %v850, %v887
    %v889 = vpop.f32.mrf.mxu0
    %890 = vdwg.mxu0
    %891 = vmatpush.bf16.msra.mxu0 0
    %892 = vmatpush.bf16.msra.mxu0 0
    %893 = vmatpush.bf16.msra.mxu0 0
    %894 = vmatpush.bf16.msra.mxu0 0
    %895 = vmatpush.bf16.msra.mxu0 0
    %896 = vmatpush.bf16.msra.mxu0 0
    %897 = vmatpush.bf16.msra.mxu0 %v869
    %898 = vmatpush.bf16.msra.mxu0 %v867
    %899 = vmatmul.bf16.gmra.mxu0 %v876
    %v900 = vpop.f32.mrf.mxu0
    %v901 = vadd.f32 %v851, %v900
    %v902 = vpop.f32.mrf.mxu0
    %903 = vdwg.mxu0
    %v904 = vld [vmem:[%s1] sm:$0xff]
    %v905 = vmul.f32 %v901, 0.5
    %v906 = vmul.f32 %v905, 1.442695
    %v907 = vpow.pop %v906
    %v908 = vmul.f32 %v904, %v907
    %v909 = vadd.f32 %v888, %v908
    %v910 = vpack.c.bf16 %v909, %v909
    %v911 = vld [vmem:[%s10] sm:$0xf]
    %v912 = vld [vmem:[%s10 + $0x4] sm:$0xf]
    %v913 = vld [vmem:[%s10 + $0x8] sm:$0xf]
    %v914 = vld [vmem:[%s10 + $0xc] sm:$0xf]
    %v915 = vld [vmem:[%s10 + $0x10] sm:$0xf]
    %v916 = vld [vmem:[%s10 + $0x14] sm:$0xf]
    %v917 = vld [vmem:[%s10 + $0x18] sm:$0xf]
    %v918 = vld [vmem:[%s10 + $0x1c] sm:$0xf]
    %v919 = vld [vmem:[%s10 + $0x20] sm:$0xf]
    %v920 = vld [vmem:[%s10 + $0x24] sm:$0xf]
    %v921 = vld [vmem:[%s10 + $0x28] sm:$0xf]
    %v922 = vld [vmem:[%s10 + $0x2c] sm:$0xf]
    %v923 = vld [vmem:[%s10 + $0x30] sm:$0xf]
    %v924 = vld [vmem:[%s10 + $0x34] sm:$0xf]
    %v925 = vld [vmem:[%s10 + $0x38] sm:$0xf]
    %v926 = vld [vmem:[%s10 + $0x3c] sm:$0xf]
    %v927 = vld [vmem:[%s11] sm:$0x1]
    %v929 = vperm.slane %v927, 0
    %v947 = vunpack.c.l.b16 %v911
    %v948 = vunpack.c.l.b16 %v912
    %v949 = vunpack.c.l.b16 %v913
    %v950 = vunpack.c.l.b16 %v914
    %v951 = vunpack.c.l.b16 %v915
    %v952 = vunpack.c.l.b16 %v916
    %v953 = vunpack.c.l.b16 %v917
    %v954 = vunpack.c.l.b16 %v918
    %v955 = vunpack.c.l.b16 %v919
    %v956 = vunpack.c.l.b16 %v920
    %v957 = vunpack.c.l.b16 %v921
    %v958 = vunpack.c.l.b16 %v922
    %v959 = vunpack.c.l.b16 %v923
    %v960 = vunpack.c.l.b16 %v924
    %v961 = vunpack.c.l.b16 %v925
    %v962 = vunpack.c.l.b16 %v926
    %v963 = vpack.c.b16 %v948, %v947
    %v964 = vpack.c.b16 %v950, %v949
    %v965 = vpack.c.b16 %v952, %v951
    %v966 = vpack.c.b16 %v954, %v953
    %v967 = vpack.c.b16 %v956, %v955
    %v968 = vpack.c.b16 %v958, %v957
    %v969 = vpack.c.b16 %v960, %v959
    %v970 = vpack.c.b16 %v962, %v961
    %979 = vmatpush.bf16.msra.mxu0 %v970
    %980 = vmatpush.bf16.msra.mxu0 %v969
    %981 = vmatpush.bf16.msra.mxu0 %v968
    %982 = vmatpush.bf16.msra.mxu0 %v967
    %983 = vmatpush.bf16.msra.mxu0 %v966
    %984 = vmatpush.bf16.msra.mxu0 %v965
    %985 = vmatpush.bf16.msra.mxu0 %v964
    %986 = vmatpush.bf16.msra.mxu0 %v963
    %987 = vmatmul.bf16.gmra.mxu0 %v910
    %v988 = vpop.f32.mrf.mxu0
    %v989 = vadd.f32 %v929, %v988
    %v990 = vpop.f32.mrf.mxu0
    %991 = vdwg.mxu0
    %v992 = vmax.f32 %v989, 0.0
    %v993 = vpack.c.bf16 %v992, %v992
    %v994 = vld [vmem:[%s12] sm:$0xff]
    %v995 = vld [vmem:[%s12 + $0x8] sm:$0xff]
    %v996 = vld [vmem:[%s12 + $0x10] sm:$0xff]
    %v997 = vld [vmem:[%s12 + $0x18] sm:$0xff]
    %v998 = vld [vmem:[%s12 + $0x20] sm:$0xff]
    %v999 = vld [vmem:[%s12 + $0x28] sm:$0xff]
    %v1000 = vld [vmem:[%s12 + $0x30] sm:$0xff]
    %v1001 = vld [vmem:[%s12 + $0x38] sm:$0xff]
    %v1002 = vld [vmem:[%s12 + $0x40] sm:$0xff]
    %v1003 = vld [vmem:[%s12 + $0x48] sm:$0xff]
    %v1004 = vld [vmem:[%s12 + $0x50] sm:$0xff]
    %v1005 = vld [vmem:[%s12 + $0x58] sm:$0xff]
    %v1006 = vld [vmem:[%s12 + $0x60] sm:$0xff]
    %v1007 = vld [vmem:[%s12 + $0x68] sm:$0xff]
    %v1008 = vld [vmem:[%s12 + $0x70] sm:$0xff]
    %v1009 = vld [vmem:[%s12 + $0x78] sm:$0xff]
    %v1010 = vld [vmem:[%s12 + $0x80] sm:$0xff]
    %v1011 = vld [vmem:[%s12 + $0x88] sm:$0xff]
    %v1012 = vld [vmem:[%s12 + $0x90] sm:$0xff]
    %v1013 = vld [vmem:[%s12 + $0x98] sm:$0xff]
    %v1014 = vld [vmem:[%s12 + $0xa0] sm:$0xff]
    %v1015 = vld [vmem:[%s12 + $0xa8] sm:$0xff]
    %v1016 = vld [vmem:[%s12 + $0xb0] sm:$0xff]
    %v1017 = vld [vmem:[%s12 + $0xb8] sm:$0xff]
    %v1018 = vld [vmem:[%s12 + $0xc0] sm:$0xff]
    %v1019 = vld [vmem:[%s12 + $0xc8] sm:$0xff]
    %v1020 = vld [vmem:[%s12 + $0xd0] sm:$0xff]
    %v1021 = vld [vmem:[%s12 + $0xd8] sm:$0xff]
    %v1022 = vld [vmem:[%s12 + $0xe0] sm:$0xff]
    %v1023 = vld [vmem:[%s12 + $0xe8] sm:$0xff]
    %v1024 = vld [vmem:[%s12 + $0xf0] sm:$0xff]
    %v1025 = vld [vmem:[%s12 + $0xf8] sm:$0xff]
    %v1026 = vld [vmem:[%s13] sm:$0xff]
    %v1028 = vperm.slane %v1026, 0
    %v1029 = vperm.slane %v1026, 1
    %v1030 = vperm.slane %v1026, 2
    %v1031 = vperm.slane %v1026, 3
    %v1032 = vperm.slane %v1026, 4
    %v1033 = vperm.slane %v1026, 5
    %v1034 = vperm.slane %v1026, 6
    %v1035 = vperm.slane %v1026, 7
    %v1076 = vunpack.c.l.b16 %v994
    %v1077 = vunpack.c.h.b16 %v994
    %v1078 = vunpack.c.l.b16 %v995
    %v1079 = vunpack.c.h.b16 %v995
    %v1080 = vunpack.c.l.b16 %v996
    %v1081 = vunpack.c.h.b16 %v996
    %v1082 = vunpack.c.l.b16 %v997
    %v1083 = vunpack.c.h.b16 %v997
    %v1084 = vunpack.c.l.b16 %v998
    %v1085 = vunpack.c.h.b16 %v998
    %v1086 = vunpack.c.l.b16 %v999
    %v1087 = vunpack.c.h.b16 %v999
    %v1088 = vunpack.c.l.b16 %v1000
    %v1089 = vunpack.c.h.b16 %v1000
    %v1090 = vunpack.c.l.b16 %v1001
    %v1091 = vunpack.c.h.b16 %v1001
    %v1092 = vunpack.c.l.b16 %v1002
    %v1093 = vunpack.c.h.b16 %v1002
    %v1094 = vunpack.c.l.b16 %v1003
    %v1095 = vunpack.c.h.b16 %v1003
    %v1096 = vunpack.c.l.b16 %v1004
    %v1097 = vunpack.c.h.b16 %v1004
    %v1098 = vunpack.c.l.b16 %v1005
    %v1099 = vunpack.c.h.b16 %v1005
    %v1100 = vunpack.c.l.b16 %v1006
    %v1101 = vunpack.c.h.b16 %v1006
    %v1102 = vunpack.c.l.b16 %v1007
    %v1103 = vunpack.c.h.b16 %v1007
    %v1104 = vunpack.c.l.b16 %v1008
    %v1105 = vunpack.c.h.b16 %v1008
    %v1106 = vunpack.c.l.b16 %v1009
    %v1107 = vunpack.c.h.b16 %v1009
    %v1108 = vunpack.c.l.b16 %v1010
    %v1109 = vunpack.c.h.b16 %v1010
    %v1110 = vunpack.c.l.b16 %v1011
    %v1111 = vunpack.c.h.b16 %v1011
    %v1112 = vunpack.c.l.b16 %v1012
    %v1113 = vunpack.c.h.b16 %v1012
    %v1114 = vunpack.c.l.b16 %v1013
    %v1115 = vunpack.c.h.b16 %v1013
    %v1116 = vunpack.c.l.b16 %v1014
    %v1117 = vunpack.c.h.b16 %v1014
    %v1118 = vunpack.c.l.b16 %v1015
    %v1119 = vunpack.c.h.b16 %v1015
    %v1120 = vunpack.c.l.b16 %v1016
    %v1121 = vunpack.c.h.b16 %v1016
    %v1122 = vunpack.c.l.b16 %v1017
    %v1123 = vunpack.c.h.b16 %v1017
    %v1124 = vunpack.c.l.b16 %v1018
    %v1125 = vunpack.c.h.b16 %v1018
    %v1126 = vunpack.c.l.b16 %v1019
    %v1127 = vunpack.c.h.b16 %v1019
    %v1128 = vunpack.c.l.b16 %v1020
    %v1129 = vunpack.c.h.b16 %v1020
    %v1130 = vunpack.c.l.b16 %v1021
    %v1131 = vunpack.c.h.b16 %v1021
    %v1132 = vunpack.c.l.b16 %v1022
    %v1133 = vunpack.c.h.b16 %v1022
    %v1134 = vunpack.c.l.b16 %v1023
    %v1135 = vunpack.c.h.b16 %v1023
    %v1136 = vunpack.c.l.b16 %v1024
    %v1137 = vunpack.c.h.b16 %v1024
    %v1138 = vunpack.c.l.b16 %v1025
    %v1139 = vunpack.c.h.b16 %v1025
    %v1140 = vpack.c.b16 %v1084, %v1076
    %v1141 = vpack.c.b16 %v1085, %v1077
    %v1142 = vpack.c.b16 %v1086, %v1078
    %v1143 = vpack.c.b16 %v1087, %v1079
    %v1144 = vpack.c.b16 %v1088, %v1080
    %v1145 = vpack.c.b16 %v1089, %v1081
    %v1146 = vpack.c.b16 %v1090, %v1082
    %v1147 = vpack.c.b16 %v1091, %v1083
    %v1148 = vpack.c.b16 %v1100, %v1092
    %v1149 = vpack.c.b16 %v1101, %v1093
    %v1150 = vpack.c.b16 %v1102, %v1094
    %v1151 = vpack.c.b16 %v1103, %v1095
    %v1152 = vpack.c.b16 %v1104, %v1096
    %v1153 = vpack.c.b16 %v1105, %v1097
    %v1154 = vpack.c.b16 %v1106, %v1098
    %v1155 = vpack.c.b16 %v1107, %v1099
    %v1156 = vpack.c.b16 %v1116, %v1108
    %v1157 = vpack.c.b16 %v1117, %v1109
    %v1158 = vpack.c.b16 %v1118, %v1110
    %v1159 = vpack.c.b16 %v1119, %v1111
    %v1160 = vpack.c.b16 %v1120, %v1112
    %v1161 = vpack.c.b16 %v1121, %v1113
    %v1162 = vpack.c.b16 %v1122, %v1114
    %v1163 = vpack.c.b16 %v1123, %v1115
    %v1164 = vpack.c.b16 %v1132, %v1124
    %v1165 = vpack.c.b16 %v1133, %v1125
    %v1166 = vpack.c.b16 %v1134, %v1126
    %v1167 = vpack.c.b16 %v1135, %v1127
    %v1168 = vpack.c.b16 %v1136, %v1128
    %v1169 = vpack.c.b16 %v1137, %v1129
    %v1170 = vpack.c.b16 %v1138, %v1130
    %v1171 = vpack.c.b16 %v1139, %v1131
    %v1205 = vsel %vm742, %v993, 0
    %1207 = vmatpush.bf16.msra.mxu0 0
    %1208 = vmatpush.bf16.msra.mxu0 0
    %1209 = vmatpush.bf16.msra.mxu0 0
    %1210 = vmatpush.bf16.msra.mxu0 0
    %1211 = vmatpush.bf16.msra.mxu0 %v1164
    %1212 = vmatpush.bf16.msra.mxu0 %v1156
    %1213 = vmatpush.bf16.msra.mxu0 %v1148
    %1214 = vmatpush.bf16.msra.mxu0 %v1140
    %1215 = vmatmul.bf16.gmra.mxu0 %v1205
    %v1216 = vpop.f32.mrf.mxu0
    %v1217 = vadd.f32 %v1028, %v1216
    %v1218 = vpop.f32.mrf.mxu0
    %1219 = vdwg.mxu0
    %1220 = vmatpush.bf16.msra.mxu0 0
    %1221 = vmatpush.bf16.msra.mxu0 0
    %1222 = vmatpush.bf16.msra.mxu0 0
    %1223 = vmatpush.bf16.msra.mxu0 0
    %1224 = vmatpush.bf16.msra.mxu0 %v1165
    %1225 = vmatpush.bf16.msra.mxu0 %v1157
    %1226 = vmatpush.bf16.msra.mxu0 %v1149
    %1227 = vmatpush.bf16.msra.mxu0 %v1141
    %1228 = vmatmul.bf16.gmra.mxu0 %v1205
    %v1229 = vpop.f32.mrf.mxu0
    %v1230 = vadd.f32 %v1029, %v1229
    %v1231 = vpop.f32.mrf.mxu0
    %1232 = vdwg.mxu0
    %1233 = vmatpush.bf16.msra.mxu0 0
    %1234 = vmatpush.bf16.msra.mxu0 0
    %1235 = vmatpush.bf16.msra.mxu0 0
    %1236 = vmatpush.bf16.msra.mxu0 0
    %1237 = vmatpush.bf16.msra.mxu0 %v1166
    %1238 = vmatpush.bf16.msra.mxu0 %v1158
    %1239 = vmatpush.bf16.msra.mxu0 %v1150
    %1240 = vmatpush.bf16.msra.mxu0 %v1142
    %1241 = vmatmul.bf16.gmra.mxu0 %v1205
    %v1242 = vpop.f32.mrf.mxu0
    %v1243 = vadd.f32 %v1030, %v1242
    %v1244 = vpop.f32.mrf.mxu0
    %1245 = vdwg.mxu0
    %1246 = vmatpush.bf16.msra.mxu0 0
    %1247 = vmatpush.bf16.msra.mxu0 0
    %1248 = vmatpush.bf16.msra.mxu0 0
    %1249 = vmatpush.bf16.msra.mxu0 0
    %1250 = vmatpush.bf16.msra.mxu0 %v1167
    %1251 = vmatpush.bf16.msra.mxu0 %v1159
    %1252 = vmatpush.bf16.msra.mxu0 %v1151
    %1253 = vmatpush.bf16.msra.mxu0 %v1143
    %1254 = vmatmul.bf16.gmra.mxu0 %v1205
    %v1255 = vpop.f32.mrf.mxu0
    %v1256 = vadd.f32 %v1031, %v1255
    %v1257 = vpop.f32.mrf.mxu0
    %1258 = vdwg.mxu0
    %1259 = vmatpush.bf16.msra.mxu0 0
    %1260 = vmatpush.bf16.msra.mxu0 0
    %1261 = vmatpush.bf16.msra.mxu0 0
    %1262 = vmatpush.bf16.msra.mxu0 0
    %1263 = vmatpush.bf16.msra.mxu0 %v1168
    %1264 = vmatpush.bf16.msra.mxu0 %v1160
    %1265 = vmatpush.bf16.msra.mxu0 %v1152
    %1266 = vmatpush.bf16.msra.mxu0 %v1144
    %1267 = vmatmul.bf16.gmra.mxu0 %v1205
    %v1268 = vpop.f32.mrf.mxu0
    %v1269 = vadd.f32 %v1032, %v1268
    %v1270 = vpop.f32.mrf.mxu0
    %1271 = vdwg.mxu0
    %1272 = vmatpush.bf16.msra.mxu0 0
    %1273 = vmatpush.bf16.msra.mxu0 0
    %1274 = vmatpush.bf16.msra.mxu0 0
    %1275 = vmatpush.bf16.msra.mxu0 0
    %1276 = vmatpush.bf16.msra.mxu0 %v1169
    %1277 = vmatpush.bf16.msra.mxu0 %v1161
    %1278 = vmatpush.bf16.msra.mxu0 %v1153
    %1279 = vmatpush.bf16.msra.mxu0 %v1145
    %1280 = vmatmul.bf16.gmra.mxu0 %v1205
    %v1281 = vpop.f32.mrf.mxu0
    %v1282 = vadd.f32 %v1033, %v1281
    %v1283 = vpop.f32.mrf.mxu0
    %1284 = vdwg.mxu0
    %1285 = vmatpush.bf16.msra.mxu0 0
    %1286 = vmatpush.bf16.msra.mxu0 0
    %1287 = vmatpush.bf16.msra.mxu0 0
    %1288 = vmatpush.bf16.msra.mxu0 0
    %1289 = vmatpush.bf16.msra.mxu0 %v1170
    %1290 = vmatpush.bf16.msra.mxu0 %v1162
    %1291 = vmatpush.bf16.msra.mxu0 %v1154
    %1292 = vmatpush.bf16.msra.mxu0 %v1146
    %1293 = vmatmul.bf16.gmra.mxu0 %v1205
    %v1294 = vpop.f32.mrf.mxu0
    %v1295 = vadd.f32 %v1034, %v1294
    %v1296 = vpop.f32.mrf.mxu0
    %1297 = vdwg.mxu0
    %1298 = vmatpush.bf16.msra.mxu0 0
    %1299 = vmatpush.bf16.msra.mxu0 0
    %1300 = vmatpush.bf16.msra.mxu0 0
    %1301 = vmatpush.bf16.msra.mxu0 0
    %1302 = vmatpush.bf16.msra.mxu0 %v1171
    %1303 = vmatpush.bf16.msra.mxu0 %v1163
    %1304 = vmatpush.bf16.msra.mxu0 %v1155
    %1305 = vmatpush.bf16.msra.mxu0 %v1147
    %1306 = vmatmul.bf16.gmra.mxu0 %v1205
    %v1307 = vpop.f32.mrf.mxu0
    %v1308 = vadd.f32 %v1035, %v1307
    %v1309 = vpop.f32.mrf.mxu0
    %1310 = vdwg.mxu0
    %v1311 = vsub.f32 0.0, %v1217
    %v1312 = vsub.f32 0.0, %v1230
    %v1313 = vsub.f32 0.0, %v1243
    %v1314 = vsub.f32 0.0, %v1256
    %v1315 = vsub.f32 0.0, %v1269
    %v1316 = vsub.f32 0.0, %v1282
    %v1317 = vsub.f32 0.0, %v1295
    %v1318 = vsub.f32 0.0, %v1308
    %v1319 = vmul.f32 %v1311, 1.442695
    %v1320 = vpow.pop %v1319
    %v1321 = vmul.f32 %v1312, 1.442695
    %v1322 = vpow.pop %v1321
    %v1323 = vmul.f32 %v1313, 1.442695
    %v1324 = vpow.pop %v1323
    %v1325 = vmul.f32 %v1314, 1.442695
    %v1326 = vpow.pop %v1325
    %v1327 = vmul.f32 %v1315, 1.442695
    %v1328 = vpow.pop %v1327
    %v1329 = vmul.f32 %v1316, 1.442695
    %v1330 = vpow.pop %v1329
    %v1331 = vmul.f32 %v1317, 1.442695
    %v1332 = vpow.pop %v1331
    %v1333 = vmul.f32 %v1318, 1.442695
    %v1334 = vpow.pop %v1333
    %v1335 = vadd.f32 %v1320, 1.0
    %v1336 = vadd.f32 %v1322, 1.0
    %v1337 = vadd.f32 %v1324, 1.0
    %v1338 = vadd.f32 %v1326, 1.0
    %v1339 = vadd.f32 %v1328, 1.0
    %v1340 = vadd.f32 %v1330, 1.0
    %v1341 = vadd.f32 %v1332, 1.0
    %v1342 = vadd.f32 %v1334, 1.0
    %v1343 = vrcp.pop %v1335
    %v1344 = vrcp.pop %v1336
    %v1345 = vrcp.pop %v1337
    %v1346 = vrcp.pop %v1338
    %v1347 = vrcp.pop %v1339
    %v1348 = vrcp.pop %v1340
    %v1349 = vrcp.pop %v1341
    %v1350 = vrcp.pop %v1342
    %v1351 = vpack.c.bf16 %v1344, %v1343
    %v1352 = vpack.c.bf16 %v1346, %v1345
    %v1353 = vpack.c.bf16 %v1348, %v1347
    %v1354 = vpack.c.bf16 %v1350, %v1349
    %1355 = vst [vmem:[#allocation2] sm:$0xff] %v1351
    %1356 = vst [vmem:[#allocation2 + $0x8] sm:$0xff] %v1352
    %1357 = vst [vmem:[#allocation2 + $0x10] sm:$0xff] %v1353
    %1358 = vst [vmem:[#allocation2 + $0x18] sm:$0xff] %v1354
    %1359 = vst [vmem:[#allocation4] sm:$0xff] %v888
    %1360 = vst [vmem:[#allocation4 + $0x8] sm:$0xff] %v901
    // Predicated region
    $region58: #{tpu_custom_call.1} parent=1 // pred_check
      _
    $region59: #{tpu_custom_call.1} parent=1 // pred_check_branch
      %1362 = sbr.rel (0) target = $region61
    $region60: #{tpu_custom_call.1} parent=1 // pred_region
      %1364 = vsyncadd [#allocation3], 0
      %s1366 = sshll.u32 [#allocation2], 4
      %s1367 = int_to_ptr.vmem [resolvable:$true] %s1366
      %s1368 = sshll.u32 %s14, 4
      %s1369 = int_to_ptr.hbm [resolvable:$true] %s1368
      %1371 = dma.vmem_to_hbm [thread:$0]  %s1367, 512, %s1369, [#allocation3]
    $region61: #{tpu_custom_call.1} parent=1 // pred_fallthru
      _
    // Predicated region
    $region62: #{tpu_custom_call.1} parent=1 // pred_check
      _
    $region63: #{tpu_custom_call.1} parent=1 // pred_check_branch
      %1373 = sbr.rel (0) target = $region65
    $region64: #{tpu_custom_call.1} parent=1 // pred_region
      %1375 = vsyncadd [#allocation5], 0
      %s1377 = sshll.u32 [#allocation4], 4
      %s1378 = int_to_ptr.vmem [resolvable:$true] %s1377
      %s1379 = sshll.u32 %s15, 4
      %s1380 = int_to_ptr.hbm [resolvable:$true] %s1379
      %1382 = dma.vmem_to_hbm [thread:$0]  %s1378, 256, %s1380, [#allocation5]
    $region65: #{tpu_custom_call.1} parent=1 // pred_fallthru
      _
    // Predicated region
    $region66: #{tpu_custom_call.1} parent=1 // pred_check
      _
    $region67: #{tpu_custom_call.1} parent=1 // pred_check_branch
      %1384 = sbr.rel (0) target = $region69
    $region68: #{tpu_custom_call.1} parent=1 // pred_region
      %1386 = dma.done [#allocation3], 512
    $region69: #{tpu_custom_call.1} parent=1 // pred_fallthru
      _
    // Predicated region
    $region70: #{tpu_custom_call.1} parent=1 // pred_check
      _
    $region71: #{tpu_custom_call.1} parent=1 // pred_check_branch
      %1388 = sbr.rel (0) target = $region73
    $region72: #{tpu_custom_call.1} parent=1 // pred_region
      %1390 = dma.done [#allocation5], 256
    $region73: #{tpu_custom_call.1} parent=1 // pred_fallthru
      _
    %1391 = vsyncpa [#allocation3], 1
    %1392 = vsyncpa [#allocation5], 1

</llo_original>
